<compile_context>
chip_gen: v7x
topology: tpu7x:2x2x1
jax: 0.10.0
libtpu: 0.0.40
codegen_flags: <defaults>
</compile_context>

<pallas_src>
import numpy as np
import jax
import jax.numpy as jnp
from jax.experimental import pallas as pl
from jax.experimental.pallas import tpu as pltpu


# ---------------------------------------------------------------------------
# Pallas kernel: whole ResonanceStack, grid = (n_layers,), layer axis "arbitrary"
# ---------------------------------------------------------------------------
def resonance_stack_kernel(cs_ref, noise_ref, dup_ref, rtp_ref, toep_ref, interp_ref,
                           gains_ref, w_ref, out_ref, cs_scr):
    """One grid step = one layer (all batch*event rows G in the block).

    cs_ref    : (C*G, F)      initial control signal, channel-major rows (layer 0 only)
    noise_ref : (1, R*G, N)   uniform(-1,1) multiplicative noise, r-major rows
    dup_ref   : (X, G, N)     layer-invariant softmax(deformation) upsampled to samples
    rtp_ref   : (1, R*G, C*G) permuted block-diagonal router of the current layer
    toep_ref  : (1, R, N, X*N) causal Toeplitz form of the unit-normed resonances (bf16/f32)
    interp_ref: (F, N)        linear-interp matrix frames -> samples
    gains_ref : SMEM (L, R)   per-layer per-resonance gains
    w_ref     : SMEM (L,)     softmax(mix)
    out_ref   : (G, N)        mix-weighted sum over layers (resident across the l axis)
    cs_scr    : VMEM (C*G, F) control-signal carry from layer l to l+1
    """
    l = pl.program_id(0)

    @pl.when(l == 0)
    def _init():
        cs_scr[...] = cs_ref[...]
        out_ref[...] = jnp.zeros_like(out_ref)

    G, N = out_ref.shape
    X = dup_ref.shape[0]
    R = gains_ref.shape[1]

    # -- routing: ONE MXU matmul; output (R*G, F) is r-major and (C == R) is
    #    directly the next layer's channel-major carry.
    routed = jnp.dot(rtp_ref[0], cs_scr[...], preferred_element_type=jnp.float32)
    cs_scr[...] = routed

    # -- linear upsample frames -> samples (one matmul), then multiplicative noise.
    up = jnp.dot(routed, interp_ref[...], preferred_element_type=jnp.float32)  # (R*G, N)
    noised = up * noise_ref[0]                                                 # (R*G, N)

    # per-layer scalars hoisted out of the inner loops
    w_l = w_ref[l]
    g_abs = [jnp.abs(gains_ref[l, r]) for r in range(R)]

    # -- fft_convolve == causal Toeplitz contraction (MXU), deformation mixing,
    #    per-resonance gain + tanh, sum over resonances.
    acc = jnp.zeros((G, N), jnp.float32)
    # TODO(synk): for production R / N, turn this static loop into a grid axis
    # (per-r Toeplitz BlockSpec, pl.Buffered if DMA is exposed) instead of
    # holding the full (R, N, X*N) block resident.
    for r in range(R):                                                 # static, small
        nr = noised[r * G:(r + 1) * G, :]                              # contiguous slice
        conv = jnp.dot(nr.astype(toep_ref.dtype), toep_ref[0, r],
                       preferred_element_type=jnp.float32)             # (G, X*N)
        xr = jnp.zeros((G, N), jnp.float32)
        for x in range(X):                                             # expressivity mix
            xr = xr + conv[:, x * N:(x + 1) * N] * dup_ref[x]
        acc = acc + jnp.tanh(xr * g_abs[r])

    out_ref[...] = out_ref[...] + w_l * acc


# ---------------------------------------------------------------------------
# Wrapper: host-side layout prep + single pallas_call
# ---------------------------------------------------------------------------
def resonance_stack_pallas(control_signal, deformations, layer_consts, mix,
                           interp_cs, interp_def, toep_dtype=jnp.bfloat16):
    B, E, C, F = control_signal.shape
    L = len(layer_consts)
    R, X, N, _ = layer_consts[0]["toep"].shape
    assert C == R, "layer chaining requires control_plane_dim == n_resonances"

    G = B * E   # all batch*event rows in one block; no chunk split (the split
                # duplicated the dominant Toeplitz HBM stream).

    # layer-invariant deformation mixing, hoisted out of the kernel (plain JAX)
    base = jnp.zeros_like(deformations).at[:, :, 0:1, :].add(1.0)
    d = jax.nn.softmax(deformations + base, axis=-2)                   # (B, E, X, DF)
    d_up = jnp.einsum('bexf,fn->bexn', d, interp_def)                  # (B, E, X, N)
    d_up = d_up.reshape(G, X, N).transpose(1, 0, 2).astype(jnp.float32)   # (X, G, N)

    # channel-major carry: row c*G + g
    cs0 = (control_signal.reshape(G, C, F).transpose(1, 0, 2)
           .reshape(C * G, F).astype(jnp.float32))

    # permuted block-diagonal router: RTP[r*G+g, c*G+g] = router^T[r, c]
    eye_g = jnp.eye(G, dtype=jnp.float32)
    rtp_all = jnp.stack(
        [jnp.einsum('rc,gh->rgch', lc["routing_t"].astype(jnp.float32), eye_g)
            .reshape(R * G, C * G) for lc in layer_consts], 0)         # (L, R*G, C*G)

    gains_all = jnp.stack([lc["gains"][:, 0] for lc in layer_consts], 0
                          ).astype(jnp.float32)                        # (L, R)
    toep_all = jnp.stack(
        [jnp.transpose(lc["toep"], (0, 2, 1, 3)).reshape(R, N, X * N)
         for lc in layer_consts], 0).astype(toep_dtype)                # (L, R, N, X*N)
    # r-major noise: row r*G + g
    noise_all = jnp.stack(
        [lc["noise"].reshape(G, R, N).transpose(1, 0, 2).reshape(R * G, N)
         for lc in layer_consts], 0).astype(jnp.float32)               # (L, R*G, N)
    w = jax.nn.softmax(mix).astype(jnp.float32)                        # (L,)

    # explicit VMEM budget: double-buffered per-layer blocks + resident blocks
    toep_bytes = R * N * X * N * jnp.dtype(toep_dtype).itemsize
    per_layer = toep_bytes + R * G * N * 4 + R * G * C * G * 4
    resident = 2 * C * G * F * 4 + X * G * N * 4 + F * N * 4 + G * N * 4
    vmem_limit = int(np.clip(2 * per_layer + resident + (4 << 20), 16 << 20, 32 << 20))

    out = pl.pallas_call(
        resonance_stack_kernel,
        out_shape=jax.ShapeDtypeStruct((G, N), jnp.float32),
        grid=(L,),
        in_specs=[
            pl.BlockSpec((C * G, F), lambda l: (0, 0)),                 # cs0 (layer 0)
            pl.BlockSpec((1, R * G, N), lambda l: (l, 0, 0)),           # noise (r-major)
            pl.BlockSpec((X, G, N), lambda l: (0, 0, 0)),               # deformation mix
            pl.BlockSpec((1, R * G, C * G), lambda l: (l, 0, 0)),       # block-diag router
            pl.BlockSpec((1, R, N, X * N), lambda l: (l, 0, 0, 0)),     # toeplitz (bf16)
            pl.BlockSpec((F, N), lambda l: (0, 0)),                     # interp matrix
            pl.BlockSpec(memory_space=pltpu.MemorySpace.SMEM),          # gains (L, R)
            pl.BlockSpec(memory_space=pltpu.MemorySpace.SMEM),          # mix weights (L,)
        ],
        out_specs=pl.BlockSpec((G, N), lambda l: (0, 0)),               # resident accum
        scratch_shapes=[pltpu.VMEM((C * G, F), jnp.float32)],
        compiler_params=pltpu.CompilerParams(
            dimension_semantics=("arbitrary",),
            vmem_limit_bytes=vmem_limit),
    )(cs0, noise_all, d_up, rtp_all, toep_all, interp_cs, gains_all, w)
    return out.reshape(B, E, N)


# ---------------------------------------------------------------------------
# Plain-JAX glue: parameter materialization (FFT), interpolation matrices, Toeplitz
# ---------------------------------------------------------------------------
def linear_interp_matrix(in_size, out_size):
    # Reproduces F.interpolate(mode='linear', align_corners=False) as a matmul.
    W = np.zeros((in_size, out_size), dtype=np.float32)
    scale = in_size / out_size
    for j in range(out_size):
        x = max((j + 0.5) * scale - 0.5, 0.0)
        i0 = min(int(np.floor(x)), in_size - 1)
        i1 = min(i0 + 1, in_size - 1)
        w1 = x - float(i0)
        W[i0, j] += 1.0 - w1
        W[i1, j] += w1
    return jnp.asarray(W)


def materialize_resonances(window_size, base_resonance, n_samples, amp, phase, decay):
    # TODO(synk): freq_domain_transfer_function_to_resonance's source isn't provided;
    # reconstructed as hann-windowed overlap-add of per-frame spectra whose magnitudes
    # decay geometrically (log-space scan) from |amp| with constant phase tanh(phase)*pi.
    res_span = 1.0 - base_resonance
    res_factor = 0.9
    amp_t = jnp.transpose(amp, (0, 2, 1))                               # (R, X, nc)
    phase_t = jnp.transpose(phase, (0, 2, 1))
    decay_t = jnp.transpose(decay, (0, 2, 1))
    step = window_size // 2
    n_frames = n_samples // step
    decay_c = base_resonance + jax.nn.sigmoid(decay_t) * res_span * res_factor
    start_phase = jnp.tanh(phase_t) * jnp.pi
    start_mags = jnp.abs(amp_t)
    t = jnp.arange(1, n_frames + 1, dtype=jnp.float32)[:, None, None, None]
    mags = start_mags[None] * jnp.exp(t * jnp.log(decay_c)[None])       # (T, R, X, nc)
    spec = mags.astype(jnp.complex64) * jnp.exp(1j * start_phase)[None]
    frames = jnp.fft.irfft(spec, n=window_size, axis=-1)                # (T, R, X, W)
    win = 0.5 - 0.5 * jnp.cos(2.0 * jnp.pi * jnp.arange(window_size) / window_size)
    frames = frames * win
    R, X = amp.shape[0], amp.shape[2]
    out = jnp.zeros((R, X, n_samples + window_size), jnp.float32)
    for ti in range(n_frames):
        out = out.at[:, :, ti * step: ti * step + window_size].add(frames[ti])
    return out[:, :, :n_samples]                                        # (R, X, N)


def unit_norm(x, axis=-1):
    n = jnp.linalg.norm(x, axis=axis, keepdims=True)
    return x / (n + 1e-8)


def build_toeplitz(res_norm):
    # T[r, x, s, t] = res[r, x, t-s] for t >= s else 0, so (signal @ T)[t] =
    # sum_{s<=t} signal[s] * res[t-s]  == fft_convolve(zero-pad to 2N) truncated to N.
    # TODO(synk): fft_convolve's source isn't provided; linear/causal convolution assumed.
    R, X, N = res_norm.shape
    idx = jnp.arange(N)
    diff = idx[None, :] - idx[:, None]                                  # (N_in, N_out)
    g = res_norm[:, :, jnp.clip(diff, 0, N - 1)]                        # (R, X, N, N)
    return jnp.where(diff >= 0, g, 0.0).astype(jnp.float32)


# ---------------------------------------------------------------------------
# Pure-JAX reference (same math, same noise) for validation
# ---------------------------------------------------------------------------
def resonance_layer_ref(cs, deformations, routing_t, toep, gains, noise,
                        interp_cs, interp_def):
    routed = jnp.einsum('rc,becf->berf', routing_t, cs)
    before = routed
    routed_up = jnp.einsum('berf,fn->bern', routed, interp_cs)
    noised = routed_up * noise
    conv = jnp.einsum('bern,rxnm->berxm', noised, toep)
    base = jnp.zeros_like(deformations).at[:, :, 0:1, :].add(1.0)
    d = jax.nn.softmax(deformations + base, axis=-2)
    d_up = jnp.einsum('bexf,fn->bexn', d, interp_def)
    x = jnp.sum(d_up[:, :, None, :, :] * conv, axis=-2)                 # (B, E, R, N)
    summed = jnp.tanh(x * jnp.abs(gains)[None, None, :, :])
    return jnp.sum(summed, axis=-2, keepdims=True), before


def resonance_stack_ref(control_signal, deformations, layer_consts, mix,
                        interp_cs, interp_def):
    cs = control_signal
    outs = []
    for lc in layer_consts:
        o, cs = resonance_layer_ref(cs, deformations, lc["routing_t"], lc["toep"],
                                    lc["gains"], lc["noise"], interp_cs, interp_def)
        outs.append(o[:, :, 0, :])
    stacked = jnp.stack(outs, axis=-1)                                  # (B, E, N, L)
    w = jax.nn.softmax(mix)
    return jnp.sum(stacked * w, axis=-1)


# ---------------------------------------------------------------------------
if __name__ == "__main__":
    B, E = 2, 2
    n_layers = 2
    n_samples = 128
    window = 32
    n_resonances = 4
    control_plane_dim = n_resonances   # required: layer k+1's control signal has R channels
    expressivity = 2
    frames = 8
    def_frames = 8
    n_coeffs = window // 2 + 1
    base_resonance = 0.5

    root = jax.random.PRNGKey(0)
    k_in, k_def, k_layers, k_noise = jax.random.split(root, 4)

    control_signal = jax.random.uniform(k_in, (B, E, control_plane_dim, frames),
                                        jnp.float32, 0.0, 1.0)
    deformations = 0.1 * jax.random.normal(k_def, (B, E, expressivity, def_frames),
                                           dtype=jnp.float32)

    interp_cs = linear_interp_matrix(frames, n_samples)
    interp_def = linear_interp_matrix(def_frames, n_samples)

    layer_keys = jax.random.split(k_layers, n_layers)
    noise_keys = jax.random.split(k_noise, n_layers)
    layer_consts = []
    for l in range(n_layers):
        kk = jax.random.split(layer_keys[l], 8)
        router = jax.random.uniform(kk[0], (control_plane_dim, n_resonances),
                                    jnp.float32, -1.0, 1.0)
        gains = jax.random.uniform(kk[1], (n_resonances, 1), jnp.float32, 0.01, 1.1)

        def init_res(ka, kb):
            r = jax.random.uniform(ka, (n_resonances, n_coeffs, 1), jnp.float32, 0.01, 1.0)
            d = jax.random.uniform(kb, (1, n_coeffs, expressivity), jnp.float32, -0.02, 0.02)
            return r + d

        amp = init_res(kk[2], kk[3])
        phase = init_res(kk[4], kk[5])
        decay = init_res(kk[6], kk[7])

        res = materialize_resonances(window, base_resonance, n_samples, amp, phase, decay)
        res = unit_norm(res, axis=-1)                                   # (R, X, N)
        toep = build_toeplitz(res)                                      # (R, X, N, N)

        # torch: routed * zeros_like(routed).uniform_(-1, 1) — replicated with jax.random
        noise = jax.random.uniform(noise_keys[l], (B, E, n_resonances, n_samples),
                                   jnp.float32, -1.0, 1.0)
        layer_consts.append(dict(routing_t=router.T, toep=toep, gains=gains, noise=noise))

    mix = jnp.zeros((n_layers,), jnp.float32)

    ref = jax.block_until_ready(
        resonance_stack_ref(control_signal, deformations, layer_consts, mix,
                            interp_cs, interp_def))

    # f32 Toeplitz path: exact kernel-math check against the f32 reference
    final_f32 = jax.block_until_ready(
        resonance_stack_pallas(control_signal, deformations, layer_consts, mix,
                               interp_cs, interp_def, toep_dtype=jnp.float32))
    assert final_f32.shape == (B, E, n_samples)
    assert bool(jnp.all(jnp.isfinite(final_f32)))
    np.testing.assert_allclose(np.asarray(final_f32), np.asarray(ref),
                               rtol=2e-3, atol=2e-3)

    # bf16 Toeplitz path (default / fast): looser tolerance for the bf16 quantization
    final = jax.block_until_ready(
        resonance_stack_pallas(control_signal, deformations, layer_consts, mix,
                               interp_cs, interp_def, toep_dtype=jnp.bfloat16))
    assert final.shape == (B, E, n_samples)
    assert bool(jnp.all(jnp.isfinite(final)))
    np.testing.assert_allclose(np.asarray(final), np.asarray(ref),
                               rtol=3e-2, atol=3e-2)

    print("KERNEL_OK")
</pallas_src>

<mosaic_0001>
module attributes {stable_mosaic.version = 11 : i64} {
  func.func @resonance_stack_kernel(%arg0: i32, %arg1: memref<16x8xf32, #tpu.memory_space<vmem>>, %arg2: memref<1x16x128xf32, #tpu.memory_space<vmem>>, %arg3: memref<2x4x128xf32, #tpu.memory_space<vmem>>, %arg4: memref<1x16x16xf32, #tpu.memory_space<vmem>>, %arg5: memref<1x4x128x256xf32, #tpu.memory_space<vmem>>, %arg6: memref<8x128xf32, #tpu.memory_space<vmem>>, %arg7: memref<2x4xf32, #tpu.memory_space<smem>>, %arg8: memref<2xf32, #tpu.memory_space<smem>>, %arg9: memref<4x128xf32, #tpu.memory_space<vmem>>, %arg10: memref<16x8xf32, #tpu.memory_space<vmem>>) attributes {dimension_semantics = [#tpu.dimension_semantics<arbitrary>], iteration_bounds = array<i64: 2>, scalar_prefetch = 0 : i64, scratch_operands = 1 : i64, tpu.core_type = #tpu.core_type<tc>, window_params = [{pipeline_mode = #tpu.pipeline_mode<synchronous>, transform_indices = @transform_0, window_bounds = array<i64: 16, 8>}, {transform_indices = @transform_1, window_bounds = array<i64: 1, 16, 128>}, {pipeline_mode = #tpu.pipeline_mode<synchronous>, transform_indices = @transform_2, window_bounds = array<i64: 2, 4, 128>}, {transform_indices = @transform_3, window_bounds = array<i64: 1, 16, 16>}, {transform_indices = @transform_4, window_bounds = array<i64: 1, 4, 128, 256>}, {pipeline_mode = #tpu.pipeline_mode<synchronous>, transform_indices = @transform_5, window_bounds = array<i64: 8, 128>}, {transform_indices = @transform_6, window_bounds = array<i64: 2, 4>}, {transform_indices = @transform_7, window_bounds = array<i64: 2>}, {pipeline_mode = #tpu.pipeline_mode<synchronous>, transform_indices = @transform_8, window_bounds = array<i64: 4, 128>}]} {
    %c0_i32 = arith.constant 0 : i32
    %0 = arith.cmpi eq, %arg0, %c0_i32 : i32
    %1 = arith.extui %0 : i1 to i32
    %c0_i32_0 = arith.constant 0 : i32
    %2 = arith.cmpi ne, %1, %c0_i32_0 : i32
    scf.if %2 {
      %c0_67 = arith.constant 0 : index
      %c0_68 = arith.constant 0 : index
      %109 = vector.load %arg1[%c0_67, %c0_68] : memref<16x8xf32, #tpu.memory_space<vmem>>, vector<16x8xf32>
      %c0_69 = arith.constant 0 : index
      %c0_70 = arith.constant 0 : index
      %110 = vector.load %arg10[%c0_69, %c0_70] : memref<16x8xf32, #tpu.memory_space<vmem>>, vector<16x8xf32>
      tpu.vector_store %arg10[%c0_69, %c0_70], %109 {strides = array<i32>} : memref<16x8xf32, #tpu.memory_space<vmem>>, vector<16x8xf32>,
      %cst_71 = arith.constant 0.000000e+00 : f32
      %111 = vector.broadcast %cst_71 : f32 to vector<4x128xf32>
      %c0_72 = arith.constant 0 : index
      %c0_73 = arith.constant 0 : index
      %112 = vector.load %arg9[%c0_72, %c0_73] : memref<4x128xf32, #tpu.memory_space<vmem>>, vector<4x128xf32>
      tpu.vector_store %arg9[%c0_72, %c0_73], %111 {strides = array<i32>} : memref<4x128xf32, #tpu.memory_space<vmem>>, vector<4x128xf32>,
    } else {
    }
    %c0 = arith.constant 0 : index
    %c0_1 = arith.constant 0 : index
    %c0_2 = arith.constant 0 : index
    %3 = vector.load %arg4[%c0, %c0_1, %c0_2] : memref<1x16x16xf32, #tpu.memory_space<vmem>>, vector<1x16x16xf32>
    %4 = vector.shape_cast %3 : vector<1x16x16xf32> to vector<16x16xf32>
    %c0_3 = arith.constant 0 : index
    %c0_4 = arith.constant 0 : index
    %5 = vector.load %arg10[%c0_3, %c0_4] : memref<16x8xf32, #tpu.memory_space<vmem>>, vector<16x8xf32>
    %cst = arith.constant dense<0.000000e+00> : vector<16x8xf32>
    %6 = tpu.matmul %4, %5, %cst {dimension_numbers = #tpu.dot_dimension_numbers<[1], [0], [0], [1], [0, 0, 1, 1], [], []>} : vector<16x16xf32>, vector<16x8xf32>, vector<16x8xf32> -> vector<16x8xf32>
    %c0_5 = arith.constant 0 : index
    %c0_6 = arith.constant 0 : index
    %7 = vector.load %arg10[%c0_5, %c0_6] : memref<16x8xf32, #tpu.memory_space<vmem>>, vector<16x8xf32>
    tpu.vector_store %arg10[%c0_5, %c0_6], %6 {strides = array<i32>} : memref<16x8xf32, #tpu.memory_space<vmem>>, vector<16x8xf32>,
    %c0_7 = arith.constant 0 : index
    %c0_8 = arith.constant 0 : index
    %8 = vector.load %arg6[%c0_7, %c0_8] : memref<8x128xf32, #tpu.memory_space<vmem>>, vector<8x128xf32>
    %cst_9 = arith.constant dense<0.000000e+00> : vector<16x128xf32>
    %9 = tpu.matmul %6, %8, %cst_9 {dimension_numbers = #tpu.dot_dimension_numbers<[1], [0], [0], [1], [0, 0, 1, 1], [], []>} : vector<16x8xf32>, vector<8x128xf32>, vector<16x128xf32> -> vector<16x128xf32>
    %c0_10 = arith.constant 0 : index
    %c0_11 = arith.constant 0 : index
    %c0_12 = arith.constant 0 : index
    %10 = vector.load %arg2[%c0_10, %c0_11, %c0_12] : memref<1x16x128xf32, #tpu.memory_space<vmem>>, vector<1x16x128xf32>
    %11 = vector.shape_cast %10 : vector<1x16x128xf32> to vector<16x128xf32>
    %12 = arith.mulf %9, %11 : vector<16x128xf32>
    %13 = arith.index_cast %arg0 : i32 to index
    %14 = memref.load %arg8[%13] : memref<2xf32, #tpu.memory_space<smem>>
    %15 = arith.index_cast %arg0 : i32 to index
    %c0_13 = arith.constant 0 : index
    %16 = memref.load %arg7[%15, %c0_13] : memref<2x4xf32, #tpu.memory_space<smem>>
    %17 = math.absf %16 : f32
    %18 = arith.index_cast %arg0 : i32 to index
    %c1 = arith.constant 1 : index
    %19 = memref.load %arg7[%18, %c1] : memref<2x4xf32, #tpu.memory_space<smem>>
    %20 = math.absf %19 : f32
    %21 = arith.index_cast %arg0 : i32 to index
    %c2 = arith.constant 2 : index
    %22 = memref.load %arg7[%21, %c2] : memref<2x4xf32, #tpu.memory_space<smem>>
    %23 = math.absf %22 : f32
    %24 = arith.index_cast %arg0 : i32 to index
    %c3 = arith.constant 3 : index
    %25 = memref.load %arg7[%24, %c3] : memref<2x4xf32, #tpu.memory_space<smem>>
    %26 = math.absf %25 : f32
    %cst_14 = arith.constant 0.000000e+00 : f32
    %27 = vector.broadcast %cst_14 : f32 to vector<4x128xf32>
    %28 = vector.extract_strided_slice %12 {offsets = [0, 0], sizes = [4, 128], strides = [1, 1]} : vector<16x128xf32> to vector<4x128xf32>
    %c0_15 = arith.constant 0 : index
    %c0_16 = arith.constant 0 : index
    %c0_17 = arith.constant 0 : index
    %c0_18 = arith.constant 0 : index
    %29 = vector.load %arg5[%c0_15, %c0_16, %c0_17, %c0_18] : memref<1x4x128x256xf32, #tpu.memory_space<vmem>>, vector<1x1x128x256xf32>
    %30 = vector.shape_cast %29 : vector<1x1x128x256xf32> to vector<128x256xf32>
    %cst_19 = arith.constant dense<0.000000e+00> : vector<4x256xf32>
    %31 = tpu.matmul %28, %30, %cst_19 {dimension_numbers = #tpu.dot_dimension_numbers<[1], [0], [0], [1], [0, 0, 1, 1], [], []>} : vector<4x128xf32>, vector<128x256xf32>, vector<4x256xf32> -> vector<4x256xf32>
    %cst_20 = arith.constant 0.000000e+00 : f32
    %32 = vector.broadcast %cst_20 : f32 to vector<4x128xf32>
    %33 = vector.extract_strided_slice %31 {offsets = [0, 0], sizes = [4, 128], strides = [1, 1]} : vector<4x256xf32> to vector<4x128xf32>
    %c0_21 = arith.constant 0 : index
    %c0_22 = arith.constant 0 : index
    %c0_23 = arith.constant 0 : index
    %34 = vector.load %arg3[%c0_21, %c0_22, %c0_23] : memref<2x4x128xf32, #tpu.memory_space<vmem>>, vector<1x4x128xf32>
    %35 = vector.shape_cast %34 : vector<1x4x128xf32> to vector<4x128xf32>
    %36 = arith.mulf %33, %35 : vector<4x128xf32>
    %37 = arith.addf %32, %36 : vector<4x128xf32>
    %38 = vector.extract_strided_slice %31 {offsets = [0, 128], sizes = [4, 128], strides = [1, 1]} : vector<4x256xf32> to vector<4x128xf32>
    %c1_24 = arith.constant 1 : index
    %c0_25 = arith.constant 0 : index
    %c0_26 = arith.constant 0 : index
    %39 = vector.load %arg3[%c1_24, %c0_25, %c0_26] : memref<2x4x128xf32, #tpu.memory_space<vmem>>, vector<1x4x128xf32>
    %40 = vector.shape_cast %39 : vector<1x4x128xf32> to vector<4x128xf32>
    %41 = arith.mulf %38, %40 : vector<4x128xf32>
    %42 = arith.addf %37, %41 : vector<4x128xf32>
    %43 = vector.broadcast %17 : f32 to vector<4x128xf32>
    %44 = arith.mulf %42, %43 : vector<4x128xf32>
    %45 = math.tanh %44 : vector<4x128xf32>
    %46 = arith.addf %27, %45 : vector<4x128xf32>
    %47 = vector.extract_strided_slice %12 {offsets = [4, 0], sizes = [4, 128], strides = [1, 1]} : vector<16x128xf32> to vector<4x128xf32>
    %c0_27 = arith.constant 0 : index
    %c1_28 = arith.constant 1 : index
    %c0_29 = arith.constant 0 : index
    %c0_30 = arith.constant 0 : index
    %48 = vector.load %arg5[%c0_27, %c1_28, %c0_29, %c0_30] : memref<1x4x128x256xf32, #tpu.memory_space<vmem>>, vector<1x1x128x256xf32>
    %49 = vector.shape_cast %48 : vector<1x1x128x256xf32> to vector<128x256xf32>
    %cst_31 = arith.constant dense<0.000000e+00> : vector<4x256xf32>
    %50 = tpu.matmul %47, %49, %cst_31 {dimension_numbers = #tpu.dot_dimension_numbers<[1], [0], [0], [1], [0, 0, 1, 1], [], []>} : vector<4x128xf32>, vector<128x256xf32>, vector<4x256xf32> -> vector<4x256xf32>
    %cst_32 = arith.constant 0.000000e+00 : f32
    %51 = vector.broadcast %cst_32 : f32 to vector<4x128xf32>
    %52 = vector.extract_strided_slice %50 {offsets = [0, 0], sizes = [4, 128], strides = [1, 1]} : vector<4x256xf32> to vector<4x128xf32>
    %c0_33 = arith.constant 0 : index
    %c0_34 = arith.constant 0 : index
    %c0_35 = arith.constant 0 : index
    %53 = vector.load %arg3[%c0_33, %c0_34, %c0_35] : memref<2x4x128xf32, #tpu.memory_space<vmem>>, vector<1x4x128xf32>
    %54 = vector.shape_cast %53 : vector<1x4x128xf32> to vector<4x128xf32>
    %55 = arith.mulf %52, %54 : vector<4x128xf32>
    %56 = arith.addf %51, %55 : vector<4x128xf32>
    %57 = vector.extract_strided_slice %50 {offsets = [0, 128], sizes = [4, 128], strides = [1, 1]} : vector<4x256xf32> to vector<4x128xf32>
    %c1_36 = arith.constant 1 : index
    %c0_37 = arith.constant 0 : index
    %c0_38 = arith.constant 0 : index
    %58 = vector.load %arg3[%c1_36, %c0_37, %c0_38] : memref<2x4x128xf32, #tpu.memory_space<vmem>>, vector<1x4x128xf32>
    %59 = vector.shape_cast %58 : vector<1x4x128xf32> to vector<4x128xf32>
    %60 = arith.mulf %57, %59 : vector<4x128xf32>
    %61 = arith.addf %56, %60 : vector<4x128xf32>
    %62 = vector.broadcast %20 : f32 to vector<4x128xf32>
    %63 = arith.mulf %61, %62 : vector<4x128xf32>
    %64 = math.tanh %63 : vector<4x128xf32>
    %65 = arith.addf %46, %64 : vector<4x128xf32>
    %66 = vector.extract_strided_slice %12 {offsets = [8, 0], sizes = [4, 128], strides = [1, 1]} : vector<16x128xf32> to vector<4x128xf32>
    %c0_39 = arith.constant 0 : index
    %c2_40 = arith.constant 2 : index
    %c0_41 = arith.constant 0 : index
    %c0_42 = arith.constant 0 : index
    %67 = vector.load %arg5[%c0_39, %c2_40, %c0_41, %c0_42] : memref<1x4x128x256xf32, #tpu.memory_space<vmem>>, vector<1x1x128x256xf32>
    %68 = vector.shape_cast %67 : vector<1x1x128x256xf32> to vector<128x256xf32>
    %cst_43 = arith.constant dense<0.000000e+00> : vector<4x256xf32>
    %69 = tpu.matmul %66, %68, %cst_43 {dimension_numbers = #tpu.dot_dimension_numbers<[1], [0], [0], [1], [0, 0, 1, 1], [], []>} : vector<4x128xf32>, vector<128x256xf32>, vector<4x256xf32> -> vector<4x256xf32>
    %cst_44 = arith.constant 0.000000e+00 : f32
    %70 = vector.broadcast %cst_44 : f32 to vector<4x128xf32>
    %71 = vector.extract_strided_slice %69 {offsets = [0, 0], sizes = [4, 128], strides = [1, 1]} : vector<4x256xf32> to vector<4x128xf32>
    %c0_45 = arith.constant 0 : index
    %c0_46 = arith.constant 0 : index
    %c0_47 = arith.constant 0 : index
    %72 = vector.load %arg3[%c0_45, %c0_46, %c0_47] : memref<2x4x128xf32, #tpu.memory_space<vmem>>, vector<1x4x128xf32>
    %73 = vector.shape_cast %72 : vector<1x4x128xf32> to vector<4x128xf32>
    %74 = arith.mulf %71, %73 : vector<4x128xf32>
    %75 = arith.addf %70, %74 : vector<4x128xf32>
    %76 = vector.extract_strided_slice %69 {offsets = [0, 128], sizes = [4, 128], strides = [1, 1]} : vector<4x256xf32> to vector<4x128xf32>
    %c1_48 = arith.constant 1 : index
    %c0_49 = arith.constant 0 : index
    %c0_50 = arith.constant 0 : index
    %77 = vector.load %arg3[%c1_48, %c0_49, %c0_50] : memref<2x4x128xf32, #tpu.memory_space<vmem>>, vector<1x4x128xf32>
    %78 = vector.shape_cast %77 : vector<1x4x128xf32> to vector<4x128xf32>
    %79 = arith.mulf %76, %78 : vector<4x128xf32>
    %80 = arith.addf %75, %79 : vector<4x128xf32>
    %81 = vector.broadcast %23 : f32 to vector<4x128xf32>
    %82 = arith.mulf %80, %81 : vector<4x128xf32>
    %83 = math.tanh %82 : vector<4x128xf32>
    %84 = arith.addf %65, %83 : vector<4x128xf32>
    %85 = vector.extract_strided_slice %12 {offsets = [12, 0], sizes = [4, 128], strides = [1, 1]} : vector<16x128xf32> to vector<4x128xf32>
    %c0_51 = arith.constant 0 : index
    %c3_52 = arith.constant 3 : index
    %c0_53 = arith.constant 0 : index
    %c0_54 = arith.constant 0 : index
    %86 = vector.load %arg5[%c0_51, %c3_52, %c0_53, %c0_54] : memref<1x4x128x256xf32, #tpu.memory_space<vmem>>, vector<1x1x128x256xf32>
    %87 = vector.shape_cast %86 : vector<1x1x128x256xf32> to vector<128x256xf32>
    %cst_55 = arith.constant dense<0.000000e+00> : vector<4x256xf32>
    %88 = tpu.matmul %85, %87, %cst_55 {dimension_numbers = #tpu.dot_dimension_numbers<[1], [0], [0], [1], [0, 0, 1, 1], [], []>} : vector<4x128xf32>, vector<128x256xf32>, vector<4x256xf32> -> vector<4x256xf32>
    %cst_56 = arith.constant 0.000000e+00 : f32
    %89 = vector.broadcast %cst_56 : f32 to vector<4x128xf32>
    %90 = vector.extract_strided_slice %88 {offsets = [0, 0], sizes = [4, 128], strides = [1, 1]} : vector<4x256xf32> to vector<4x128xf32>
    %c0_57 = arith.constant 0 : index
    %c0_58 = arith.constant 0 : index
    %c0_59 = arith.constant 0 : index
    %91 = vector.load %arg3[%c0_57, %c0_58, %c0_59] : memref<2x4x128xf32, #tpu.memory_space<vmem>>, vector<1x4x128xf32>
    %92 = vector.shape_cast %91 : vector<1x4x128xf32> to vector<4x128xf32>
    %93 = arith.mulf %90, %92 : vector<4x128xf32>
    %94 = arith.addf %89, %93 : vector<4x128xf32>
    %95 = vector.extract_strided_slice %88 {offsets = [0, 128], sizes = [4, 128], strides = [1, 1]} : vector<4x256xf32> to vector<4x128xf32>
    %c1_60 = arith.constant 1 : index
    %c0_61 = arith.constant 0 : index
    %c0_62 = arith.constant 0 : index
    %96 = vector.load %arg3[%c1_60, %c0_61, %c0_62] : memref<2x4x128xf32, #tpu.memory_space<vmem>>, vector<1x4x128xf32>
    %97 = vector.shape_cast %96 : vector<1x4x128xf32> to vector<4x128xf32>
    %98 = arith.mulf %95, %97 : vector<4x128xf32>
    %99 = arith.addf %94, %98 : vector<4x128xf32>
    %100 = vector.broadcast %26 : f32 to vector<4x128xf32>
    %101 = arith.mulf %99, %100 : vector<4x128xf32>
    %102 = math.tanh %101 : vector<4x128xf32>
    %103 = arith.addf %84, %102 : vector<4x128xf32>
    %c0_63 = arith.constant 0 : index
    %c0_64 = arith.constant 0 : index
    %104 = vector.load %arg9[%c0_63, %c0_64] : memref<4x128xf32, #tpu.memory_space<vmem>>, vector<4x128xf32>
    %105 = vector.broadcast %14 : f32 to vector<4x128xf32>
    %106 = arith.mulf %105, %103 : vector<4x128xf32>
    %107 = arith.addf %104, %106 : vector<4x128xf32>
    %c0_65 = arith.constant 0 : index
    %c0_66 = arith.constant 0 : index
    %108 = vector.load %arg9[%c0_65, %c0_66] : memref<4x128xf32, #tpu.memory_space<vmem>>, vector<4x128xf32>
    tpu.vector_store %arg9[%c0_65, %c0_66], %107 {strides = array<i32>} : memref<4x128xf32, #tpu.memory_space<vmem>>, vector<4x128xf32>,
    return
  }
  func.func @transform_0(%arg0: i32) -> (i32, i32) {
    %c0_i32 = arith.constant 0 : i32
    %c0_i32_0 = arith.constant 0 : i32
    %c0_i32_1 = arith.constant 0 : i32
    return %c0_i32, %c0_i32_0 : i32, i32
  }
  func.func @transform_1(%arg0: i32) -> (i32, i32, i32) {
    %c0_i32 = arith.constant 0 : i32
    %c0_i32_0 = arith.constant 0 : i32
    %c0_i32_1 = arith.constant 0 : i32
    return %arg0, %c0_i32, %c0_i32_0 : i32, i32, i32
  }
  func.func @transform_2(%arg0: i32) -> (i32, i32, i32) {
    %c0_i32 = arith.constant 0 : i32
    %c0_i32_0 = arith.constant 0 : i32
    %c0_i32_1 = arith.constant 0 : i32
    %c0_i32_2 = arith.constant 0 : i32
    return %c0_i32, %c0_i32_0, %c0_i32_1 : i32, i32, i32
  }
  func.func @transform_3(%arg0: i32) -> (i32, i32, i32) {
    %c0_i32 = arith.constant 0 : i32
    %c0_i32_0 = arith.constant 0 : i32
    %c0_i32_1 = arith.constant 0 : i32
    return %arg0, %c0_i32, %c0_i32_0 : i32, i32, i32
  }
  func.func @transform_4(%arg0: i32) -> (i32, i32, i32, i32) {
    %c0_i32 = arith.constant 0 : i32
    %c0_i32_0 = arith.constant 0 : i32
    %c0_i32_1 = arith.constant 0 : i32
    %c0_i32_2 = arith.constant 0 : i32
    return %arg0, %c0_i32, %c0_i32_0, %c0_i32_1 : i32, i32, i32, i32
  }
  func.func @transform_5(%arg0: i32) -> (i32, i32) {
    %c0_i32 = arith.constant 0 : i32
    %c0_i32_0 = arith.constant 0 : i32
    %c0_i32_1 = arith.constant 0 : i32
    return %c0_i32, %c0_i32_0 : i32, i32
  }
  func.func @transform_6(%arg0: i32) -> (i32, i32) {
    %c0_i32 = arith.constant 0 : i32
    %c0_i32_0 = arith.constant 0 : i32
    %c0_i32_1 = arith.constant 0 : i32
    return %c0_i32, %c0_i32_0 : i32, i32
  }
  func.func @transform_7(%arg0: i32) -> i32 {
    %c0_i32 = arith.constant 0 : i32
    %c0_i32_0 = arith.constant 0 : i32
    return %c0_i32 : i32
  }
  func.func @transform_8(%arg0: i32) -> (i32, i32) {
    %c0_i32 = arith.constant 0 : i32
    %c0_i32_0 = arith.constant 0 : i32
    %c0_i32_1 = arith.constant 0 : i32
    return %c0_i32, %c0_i32_0 : i32, i32
  }
}

</mosaic_0001>

<llo_original>
// kernel: tpu_custom_call.1
$region0: #{tpu_custom_call.1}
  #allocation0 [shape = 'u32[]', space=smem, size = 0x4, offset = 0x4, fixed_abs, tag = 'smem constant byte address 0x4 - core index']
  #allocation1 [shape = 'u32[144,128]{1,0:T(1,128)}', space=vmem, size = 0x12000, scoped, tag = 'internal scratch']
  #allocation2 [shape = 'f32[16,8]{1,0:T(8,128)}', space=vmem, size = 0x2000, scoped, tag = 'scratch operand']
  %s0 = inlined_call_operand.vmem [shape: f32[16,8], index: 0, kind: input, shape index: {}]
  %s1 = inlined_call_operand.hbm [shape: f32[2,16,128], index: 1, kind: input, shape index: {}]
  %s2 = inlined_call_operand.hbm [shape: f32[2,4,128], index: 2, kind: input, shape index: {}]
  %s3 = inlined_call_operand.vmem [shape: f32[2,16,16], index: 3, kind: input, shape index: {}]
  %s4 = inlined_call_operand.hbm [shape: f32[2,4,128,256], index: 4, kind: input, shape index: {}]
  %s5 = inlined_call_operand.vmem [shape: f32[8,128], index: 5, kind: input, shape index: {}]
  %s6 = inlined_call_operand.vmem [shape: f32[2,4], index: 6, kind: input, shape index: {}]
  %s7 = inlined_call_operand.vmem [shape: f32[2], index: 7, kind: input, shape index: {}]
  %s8 = inlined_call_operand.hbm [shape: f32[4,128], index: 8, kind: output, shape index: {}]
  %s9 = sld [smem:[#allocation0]]
  $region89: #{tpu_custom_call.1} parent=0
    _
  %s11 = ssub.s32 1, %s9
  %s12 = scalar_select 0, %s11, %s9
  $region1: #{tpu_custom_call.1} parent=0
    #allocation3 [shape = 'u8[16384]{0}', space=vmem, size = 0x4000, scoped, tag = 'input window, operand 1']
    #allocation4 [shape = 's32[2]{0}', space=sflag, size = 0x8, scoped, tag = 'scoped memory for tpu_custom_call.1']
    #allocation5 [shape = 's32[2]{0}', space=sflag, size = 0x8, scoped, tag = 'scoped memory for tpu_custom_call.1']
    #allocation6 [shape = 's32[2]{0}', space=sflag, size = 0x8, scoped, tag = 'scoped memory for tpu_custom_call.1']
    #allocation7 [shape = 'u8[4096]{0}', space=vmem, size = 0x1000, scoped, tag = 'input window, operand 2, single buffered']
    #allocation8 [shape = 's32[1]{0}', space=sflag, size = 0x4, scoped, tag = 'scoped memory for tpu_custom_call.1']
    #allocation9 [shape = 'u8[1048576]{0}', space=vmem, size = 0x100000, scoped, tag = 'input window, operand 4']
    #allocation10 [shape = 'u8[1024]{0}', space=smem, size = 0x400, scoped, tag = 'input window, operand 6, single buffered']
    #allocation11 [shape = 'u8[512]{0}', space=smem, size = 0x200, scoped, tag = 'input window, operand 7, single buffered']
    #allocation12 [shape = 's32[1]{0}', space=sflag, size = 0x4, scoped, tag = 'scoped memory for tpu_custom_call.1']
    #allocation13 [shape = 'u8[2048]{0}', space=vmem, size = 0x800, scoped, tag = 'output window, operand 0, single buffered']
    %13 = vsyncpa [#allocation4], 0
    %s14 = scalar_lea.sflag [#allocation4], 1
    %15 = vsyncpa %s14, 0
    %16 = vsyncpa [#allocation8], 0
    %17 = vsyncpa [#allocation6], 0
    %18 = vsyncpa [#allocation12], 0
    %19 = vsyncpa [#allocation5], 0
    loop: start=0, step=1, limit=4
    $region2: #{tpu_custom_call.1} parent=1 // loop_pre_header
      _
    $region3: #{tpu_custom_call.1} parent=1 // loop_header
      %s21 = sphi 0, %s25
      %p22 = scmp.ge.s32.totalorder %s21, 4
      %s29 = sphi 0, %s29
      %s31 = sphi 0, %s29
      %s32 = sphi 0, %s31
      %s46 = sphi 0, %s32
      %s52 = sphi 0, %s54
      %s55 = sphi 0, %s52
      %s56 = sphi 0, %s55
      %s72 = sphi 0, %s56
      %s76 = sphi 0, %s76
      %s78 = sphi 0, %s76
      %s79 = sphi 0, %s78
      %s93 = sphi 0, %s79
      %s99 = sphi 0, %s101
      %s102 = sphi 0, %s99
      %s103 = sphi 0, %s102
      %s119 = sphi 0, %s103
      %s125 = sphi 0, %s127
      %s128 = sphi 0, %s125
      %s129 = sphi 0, %s128
      %s145 = sphi 0, %s129
      %s149 = sphi 0, %s149
      %s151 = sphi 0, %s149
      %s152 = sphi 0, %s151
      %s166 = sphi 0, %s152
      %s170 = sphi 0, %s170
      %s172 = sphi 0, %s170
      %s173 = sphi 0, %s172
      %s187 = sphi 0, %s173
      %s191 = sphi 0, %s191
      %s193 = sphi 0, %s191
      %s194 = sphi 0, %s193
      %s208 = sphi 0, %s194
      %s212 = sphi 0, %s212
      %s214 = sphi 0, %s212
      %s215 = sphi 0, %s214
      %s229 = sphi 0, %s215
    $region4: #{tpu_custom_call.1} parent=1 // loop_header_branch
      %24 = sbr.rel (%p22) target = $region8
    $region5: #{tpu_custom_call.1} parent=1 // loop_body
      %s26 = ssub.s32 %s21, 1
      %s27 = ssub.s32 %s21, 2
      %s28 = sadd.s32 %s21, 1
      %s30 = sadd.s32 %s29, 1
      %p33 = scmp.eq.s32.totalorder %s21, 1
      %p34 = scmp.ne.s32.totalorder %s29, %s31
      %p35 = scmp.eq.s32.totalorder %s21, 0
      %p36 = por %p34, %p35
      %p37 = scmp.ne.s32.totalorder %s29, %s31
      %p38 = scmp.eq.s32.totalorder %s26, 1
      %p39 = por %p37, %p38
      %p40 = scmp.ne.s32.totalorder %s31, %s32
      %p41 = scmp.eq.s32.totalorder %s26, 0
      %p42 = por %p40, %p41
      %p43 = scmp.ne.s32.totalorder %s31, %s32
      %p44 = scmp.eq.s32.totalorder %s27, 1
      %p45 = por %p43, %p44
      %p47 = scmp.ne.s32.totalorder %s32, %s46
      %p48 = scmp.eq.s32.totalorder %s27, 0
      %p49 = por %p47, %p48
      %s50 = ssub.s32 %s21, %s28
      %p51 = scmp.eq.s32.totalorder %s50, 0
      %s53 = sadd.s32 %s52, 1
      %s54 = scalar_select %p51, %s52, %s53
      %p57 = pneg %p51
      %p58 = scmp.eq.s32.totalorder %s21, 1
      %p59 = por %p57, %p58
      %p60 = scmp.ne.s32.totalorder %s52, %s55
      %p61 = scmp.eq.s32.totalorder %s21, 0
      %p62 = por %p60, %p61
      %p63 = scmp.ne.s32.totalorder %s52, %s55
      %p64 = scmp.eq.s32.totalorder %s26, 1
      %p65 = por %p63, %p64
      %p66 = scmp.ne.s32.totalorder %s55, %s56
      %p67 = scmp.eq.s32.totalorder %s26, 0
      %p68 = por %p66, %p67
      %p69 = scmp.ne.s32.totalorder %s55, %s56
      %p70 = scmp.eq.s32.totalorder %s27, 1
      %p71 = por %p69, %p70
      %p73 = scmp.ne.s32.totalorder %s56, %s72
      %p74 = scmp.eq.s32.totalorder %s27, 0
      %p75 = por %p73, %p74
      %s77 = sadd.s32 %s76, 1
      %p80 = scmp.eq.s32.totalorder %s21, 1
      %p81 = scmp.ne.s32.totalorder %s76, %s78
      %p82 = scmp.eq.s32.totalorder %s21, 0
      %p83 = por %p81, %p82
      %p84 = scmp.ne.s32.totalorder %s76, %s78
      %p85 = scmp.eq.s32.totalorder %s26, 1
      %p86 = por %p84, %p85
      %p87 = scmp.ne.s32.totalorder %s78, %s79
      %p88 = scmp.eq.s32.totalorder %s26, 0
      %p89 = por %p87, %p88
      %p90 = scmp.ne.s32.totalorder %s78, %s79
      %p91 = scmp.eq.s32.totalorder %s27, 1
      %p92 = por %p90, %p91
      %p94 = scmp.ne.s32.totalorder %s79, %s93
      %p95 = scmp.eq.s32.totalorder %s27, 0
      %p96 = por %p94, %p95
      %s97 = ssub.s32 %s21, %s28
      %p98 = scmp.eq.s32.totalorder %s97, 0
      %s100 = sadd.s32 %s99, 1
      %s101 = scalar_select %p98, %s99, %s100
      %p104 = pneg %p98
      %p105 = scmp.eq.s32.totalorder %s21, 1
      %p106 = por %p104, %p105
      %p107 = scmp.ne.s32.totalorder %s99, %s102
      %p108 = scmp.eq.s32.totalorder %s21, 0
      %p109 = por %p107, %p108
      %p110 = scmp.ne.s32.totalorder %s99, %s102
      %p111 = scmp.eq.s32.totalorder %s26, 1
      %p112 = por %p110, %p111
      %p113 = scmp.ne.s32.totalorder %s102, %s103
      %p114 = scmp.eq.s32.totalorder %s26, 0
      %p115 = por %p113, %p114
      %p116 = scmp.ne.s32.totalorder %s102, %s103
      %p117 = scmp.eq.s32.totalorder %s27, 1
      %p118 = por %p116, %p117
      %p120 = scmp.ne.s32.totalorder %s103, %s119
      %p121 = scmp.eq.s32.totalorder %s27, 0
      %p122 = por %p120, %p121
      %s123 = ssub.s32 %s21, %s28
      %p124 = scmp.eq.s32.totalorder %s123, 0
      %s126 = sadd.s32 %s125, 1
      %s127 = scalar_select %p124, %s125, %s126
      %p130 = pneg %p124
      %p131 = scmp.eq.s32.totalorder %s21, 1
      %p132 = por %p130, %p131
      %p133 = scmp.ne.s32.totalorder %s125, %s128
      %p134 = scmp.eq.s32.totalorder %s21, 0
      %p135 = por %p133, %p134
      %p136 = scmp.ne.s32.totalorder %s125, %s128
      %p137 = scmp.eq.s32.totalorder %s26, 1
      %p138 = por %p136, %p137
      %p139 = scmp.ne.s32.totalorder %s128, %s129
      %p140 = scmp.eq.s32.totalorder %s26, 0
      %p141 = por %p139, %p140
      %p142 = scmp.ne.s32.totalorder %s128, %s129
      %p143 = scmp.eq.s32.totalorder %s27, 1
      %p144 = por %p142, %p143
      %p146 = scmp.ne.s32.totalorder %s129, %s145
      %p147 = scmp.eq.s32.totalorder %s27, 0
      %p148 = por %p146, %p147
      %s150 = sadd.s32 %s149, 1
      %p153 = scmp.eq.s32.totalorder %s21, 1
      %p154 = scmp.ne.s32.totalorder %s149, %s151
      %p155 = scmp.eq.s32.totalorder %s21, 0
      %p156 = por %p154, %p155
      %p157 = scmp.ne.s32.totalorder %s149, %s151
      %p158 = scmp.eq.s32.totalorder %s26, 1
      %p159 = por %p157, %p158
      %p160 = scmp.ne.s32.totalorder %s151, %s152
      %p161 = scmp.eq.s32.totalorder %s26, 0
      %p162 = por %p160, %p161
      %p163 = scmp.ne.s32.totalorder %s151, %s152
      %p164 = scmp.eq.s32.totalorder %s27, 1
      %p165 = por %p163, %p164
      %p167 = scmp.ne.s32.totalorder %s152, %s166
      %p168 = scmp.eq.s32.totalorder %s27, 0
      %p169 = por %p167, %p168
      %s171 = sadd.s32 %s170, 1
      %p174 = scmp.eq.s32.totalorder %s21, 1
      %p175 = scmp.ne.s32.totalorder %s170, %s172
      %p176 = scmp.eq.s32.totalorder %s21, 0
      %p177 = por %p175, %p176
      %p178 = scmp.ne.s32.totalorder %s170, %s172
      %p179 = scmp.eq.s32.totalorder %s26, 1
      %p180 = por %p178, %p179
      %p181 = scmp.ne.s32.totalorder %s172, %s173
      %p182 = scmp.eq.s32.totalorder %s26, 0
      %p183 = por %p181, %p182
      %p184 = scmp.ne.s32.totalorder %s172, %s173
      %p185 = scmp.eq.s32.totalorder %s27, 1
      %p186 = por %p184, %p185
      %p188 = scmp.ne.s32.totalorder %s173, %s187
      %p189 = scmp.eq.s32.totalorder %s27, 0
      %p190 = por %p188, %p189
      %s192 = sadd.s32 %s191, 1
      %p195 = scmp.eq.s32.totalorder %s21, 1
      %p196 = scmp.ne.s32.totalorder %s191, %s193
      %p197 = scmp.eq.s32.totalorder %s21, 0
      %p198 = por %p196, %p197
      %p199 = scmp.ne.s32.totalorder %s191, %s193
      %p200 = scmp.eq.s32.totalorder %s26, 1
      %p201 = por %p199, %p200
      %p202 = scmp.ne.s32.totalorder %s193, %s194
      %p203 = scmp.eq.s32.totalorder %s26, 0
      %p204 = por %p202, %p203
      %p205 = scmp.ne.s32.totalorder %s193, %s194
      %p206 = scmp.eq.s32.totalorder %s27, 1
      %p207 = por %p205, %p206
      %p209 = scmp.ne.s32.totalorder %s194, %s208
      %p210 = scmp.eq.s32.totalorder %s27, 0
      %p211 = por %p209, %p210
      %s213 = sadd.s32 %s212, 1
      %p216 = scmp.eq.s32.totalorder %s21, 1
      %p217 = scmp.ne.s32.totalorder %s212, %s214
      %p218 = scmp.eq.s32.totalorder %s21, 0
      %p219 = por %p217, %p218
      %p220 = scmp.ne.s32.totalorder %s212, %s214
      %p221 = scmp.eq.s32.totalorder %s26, 1
      %p222 = por %p220, %p221
      %p223 = scmp.ne.s32.totalorder %s214, %s215
      %p224 = scmp.eq.s32.totalorder %s26, 0
      %p225 = por %p223, %p224
      %p226 = scmp.ne.s32.totalorder %s214, %s215
      %p227 = scmp.eq.s32.totalorder %s27, 1
      %p228 = por %p226, %p227
      %p230 = scmp.ne.s32.totalorder %s215, %s229
      %p231 = scmp.eq.s32.totalorder %s27, 0
      %p232 = por %p230, %p231
      %p233 = scmp.le.s32.totalorder 1, %s21
      %p234 = scmp.lt.s32.totalorder %s21, 3
      %p235 = pnand %p233, %p234
      %p236 = pneg %p235
      // Predicated region
      $region9: #{tpu_custom_call.1} parent=5 // pred_check
        _
      $region10: #{tpu_custom_call.1} parent=5 // pred_check_branch
        %238 = sbr.rel (%p235) target = $region12
      $region11: #{tpu_custom_call.1} parent=5 // pred_region
        %s239 = ssub.s32 %s21, 1
        // Predicated region
        $region13: #{tpu_custom_call.1} parent=11 // pred_check
          %p240 = pneg %p42
        $region14: #{tpu_custom_call.1} parent=11 // pred_check_branch
          %242 = sbr.rel (%p240) target = $region16
        $region15: #{tpu_custom_call.1} parent=11 // pred_region
          _
        $region16: #{tpu_custom_call.1} parent=11 // pred_fallthru
          _
        // Predicated region
        $region17: #{tpu_custom_call.1} parent=11 // pred_check
          %p243 = pneg %p89
        $region18: #{tpu_custom_call.1} parent=11 // pred_check_branch
          %245 = sbr.rel (%p243) target = $region20
        $region19: #{tpu_custom_call.1} parent=11 // pred_region
          %s247 = ssub.s32 128, 128
          %248 = vsyncadd [#allocation8], %s247
          %s249 = sshll.u32 [#allocation7], 4
          %s250 = int_to_ptr.vmem [resolvable:$true] %s249
          %255 = dma.hbm_to_vmem [thread:$0]  %s2, 128, %s250, [#allocation8], 64, 64, 4
        $region20: #{tpu_custom_call.1} parent=11 // pred_fallthru
          _
        // Predicated region
        $region21: #{tpu_custom_call.1} parent=11 // pred_check
          %p256 = pneg %p162
        $region22: #{tpu_custom_call.1} parent=11 // pred_check_branch
          %258 = sbr.rel (%p256) target = $region24
        $region23: #{tpu_custom_call.1} parent=11 // pred_region
          _
        $region24: #{tpu_custom_call.1} parent=11 // pred_fallthru
          _
        // Predicated region
        $region25: #{tpu_custom_call.1} parent=11 // pred_check
          %p259 = pneg %p183
        $region26: #{tpu_custom_call.1} parent=11 // pred_check_branch
          %261 = sbr.rel (%p259) target = $region28
        $region27: #{tpu_custom_call.1} parent=11 // pred_region
          %s263 = ssub.s32 32, 32
          %264 = vsyncadd [#allocation6], %s263
          %s266 = sshll.u32 %s6, 4
          %s267 = int_to_ptr.vmem [resolvable:$true] %s266
          %269 = dma.vmem_to_smem %s267, 32, [#allocation10], [#allocation6]
        $region28: #{tpu_custom_call.1} parent=11 // pred_fallthru
          _
        // Predicated region
        $region29: #{tpu_custom_call.1} parent=11 // pred_check
          %p270 = pneg %p204
        $region30: #{tpu_custom_call.1} parent=11 // pred_check_branch
          %272 = sbr.rel (%p270) target = $region32
        $region31: #{tpu_custom_call.1} parent=11 // pred_region
          %s274 = ssub.s32 16, 16
          %275 = vsyncadd [#allocation12], %s274
          %s277 = sshll.u32 %s7, 4
          %s278 = int_to_ptr.vmem [resolvable:$true] %s277
          %280 = dma.vmem_to_smem %s278, 16, [#allocation11], [#allocation12]
        $region32: #{tpu_custom_call.1} parent=11 // pred_fallthru
          _
      $region12: #{tpu_custom_call.1} parent=5 // pred_fallthru
        _
      %p281 = scmp.lt.s32.totalorder %s21, 2
      // Predicated region
      $region33: #{tpu_custom_call.1} parent=5 // pred_check
        %p282 = pneg %p281
      $region34: #{tpu_custom_call.1} parent=5 // pred_check_branch
        %284 = sbr.rel (%p282) target = $region36
      $region35: #{tpu_custom_call.1} parent=5 // pred_region
        // Predicated region
        $region37: #{tpu_custom_call.1} parent=35 // pred_check
          %p285 = pneg %p62
        $region38: #{tpu_custom_call.1} parent=35 // pred_check_branch
          %287 = sbr.rel (%p285) target = $region40
        $region39: #{tpu_custom_call.1} parent=35 // pred_region
          %s288 = sand.u32 %s21, 1
          %s289 = scalar_lea.sflag [#allocation4], %s288
          %s290 = sand.u32 %s52, 1
          %s291 = smul.addr %s290, 16
          %s292 = scalar_lea.vmem [#allocation3], %s291
          %s294 = ssub.s32 256, 256
          %295 = vsyncadd %s289, %s294
          %s296 = smul.addr %s21, 2
          %s297 = smul.addr %s296, 128
          %s298 = scalar_lea.hbm %s1, %s297
          %s299 = sshll.u32 %s292, 4
          %s300 = int_to_ptr.vmem [resolvable:$true] %s299
          %305 = dma.hbm_to_vmem [thread:$0]  %s298, 256, %s300, %s289, 128, 128, 8
        $region40: #{tpu_custom_call.1} parent=35 // pred_fallthru
          _
        // Predicated region
        $region41: #{tpu_custom_call.1} parent=35 // pred_check
          %p306 = pneg %p109
        $region42: #{tpu_custom_call.1} parent=35 // pred_check_branch
          %308 = sbr.rel (%p306) target = $region44
        $region43: #{tpu_custom_call.1} parent=35 // pred_region
          %p309 = scmp.lt.s32.totalorder %s21, 1
          %s310 = scalar_select %p309, %s21, 1
          %s311 = smul.addr %s310, 2
          %s312 = smul.addr %s311, 8
          %s313 = scalar_lea.vmem %s3, %s312
        $region44: #{tpu_custom_call.1} parent=35 // pred_fallthru
          _
        // Predicated region
        $region45: #{tpu_custom_call.1} parent=35 // pred_check
          %p314 = pneg %p135
        $region46: #{tpu_custom_call.1} parent=35 // pred_check_branch
          %316 = sbr.rel (%p314) target = $region48
        $region47: #{tpu_custom_call.1} parent=35 // pred_region
          %s317 = sand.u32 %s21, 1
          %s318 = scalar_lea.sflag [#allocation4], %s317
          %s319 = sand.u32 %s125, 1
          %s320 = smul.addr %s319, 1024
          %s321 = scalar_lea.vmem [#allocation9], %s320
          %s323 = ssub.s32 16384, 16384
          %324 = vsyncadd %s318, %s323
          %s325 = smul.addr %s21, 128
          %s326 = smul.addr %s325, 128
          %s327 = scalar_lea.hbm %s4, %s326
          %s328 = sshll.u32 %s321, 4
          %s329 = int_to_ptr.vmem [resolvable:$true] %s328
          %334 = dma.hbm_to_vmem [thread:$0]  %s327, 16384, %s329, %s318, 256, 256, 16
        $region48: #{tpu_custom_call.1} parent=35 // pred_fallthru
          _
      $region36: #{tpu_custom_call.1} parent=5 // pred_fallthru
        _
      %p335 = scmp.le.s32.totalorder 1, %s21
      %p336 = scmp.lt.s32.totalorder %s21, 3
      %p337 = pnand %p335, %p336
      %p338 = pneg %p337
      // Predicated region
      $region49: #{tpu_custom_call.1} parent=5 // pred_check
        _
      $region50: #{tpu_custom_call.1} parent=5 // pred_check_branch
        %340 = sbr.rel (%p337) target = $region52
      $region51: #{tpu_custom_call.1} parent=5 // pred_region
        %s341 = ssub.s32 %s21, 1
        %s342 = sand.u32 %s26, 1
        %s343 = scalar_lea.sflag [#allocation4], %s342
        %s344 = sand.u32 %s55, 1
        %s345 = smul.addr %s344, 16
        %s346 = scalar_lea.vmem [#allocation3], %s345
        // Predicated region
        $region53: #{tpu_custom_call.1} parent=51 // pred_check
          %p347 = pneg %p68
        $region54: #{tpu_custom_call.1} parent=51 // pred_check_branch
          %349 = sbr.rel (%p347) target = $region56
        $region55: #{tpu_custom_call.1} parent=51 // pred_region
          %350 = dma.done %s343, 256
        $region56: #{tpu_custom_call.1} parent=51 // pred_fallthru
          _
        // Predicated region
        $region57: #{tpu_custom_call.1} parent=51 // pred_check
          %p351 = pneg %p89
        $region58: #{tpu_custom_call.1} parent=51 // pred_check_branch
          %353 = sbr.rel (%p351) target = $region60
        $region59: #{tpu_custom_call.1} parent=51 // pred_region
          %354 = dma.done [#allocation8], 128
        $region60: #{tpu_custom_call.1} parent=51 // pred_fallthru
          _
        %s355 = sand.u32 %s26, 1
        %s356 = scalar_lea.sflag [#allocation4], %s355
        %s357 = sand.u32 %s128, 1
        %s358 = smul.addr %s357, 1024
        %s359 = scalar_lea.vmem [#allocation9], %s358
        // Predicated region
        $region61: #{tpu_custom_call.1} parent=51 // pred_check
          %p360 = pneg %p141
        $region62: #{tpu_custom_call.1} parent=51 // pred_check_branch
          %362 = sbr.rel (%p360) target = $region64
        $region63: #{tpu_custom_call.1} parent=51 // pred_region
          %363 = dma.done %s356, 16384
        $region64: #{tpu_custom_call.1} parent=51 // pred_fallthru
          _
        // Predicated region
        $region65: #{tpu_custom_call.1} parent=51 // pred_check
          %p364 = pneg %p183
        $region66: #{tpu_custom_call.1} parent=51 // pred_check_branch
          %366 = sbr.rel (%p364) target = $region68
        $region67: #{tpu_custom_call.1} parent=51 // pred_region
          %367 = dma.done [#allocation6], 32
        $region68: #{tpu_custom_call.1} parent=51 // pred_fallthru
          _
        // Predicated region
        $region69: #{tpu_custom_call.1} parent=51 // pred_check
          %p368 = pneg %p204
        $region70: #{tpu_custom_call.1} parent=51 // pred_check_branch
          %370 = sbr.rel (%p368) target = $region72
        $region71: #{tpu_custom_call.1} parent=51 // pred_region
          %371 = dma.done [#allocation12], 16
        $region72: #{tpu_custom_call.1} parent=51 // pred_fallthru
          _
        %372 = sfence
        %p373 = pneg %p42
        %p374 = pneg %p39
        %s375 = sand.u32 %s26, 1
        %s376 = scalar_lea.sflag [#allocation4], %s375
        %s377 = sand.u32 %s55, 1
        %s378 = smul.addr %s377, 16
        %s379 = scalar_lea.vmem [#allocation3], %s378
        %p380 = pneg %p68
        %p381 = pneg %p65
        %p382 = pneg %p89
        %p383 = pneg %p86
        %p384 = scmp.lt.s32.totalorder %s26, 1
        %s385 = scalar_select %p384, %s26, 1
        %s386 = smul.addr %s385, 2
        %s387 = smul.addr %s386, 8
        %s388 = scalar_lea.vmem %s3, %s387
        %p389 = pneg %p115
        %p390 = pneg %p112
        %s391 = sand.u32 %s26, 1
        %s392 = scalar_lea.sflag [#allocation4], %s391
        %s393 = sand.u32 %s128, 1
        %s394 = smul.addr %s393, 1024
        %s395 = scalar_lea.vmem [#allocation9], %s394
        %p396 = pneg %p141
        %p397 = pneg %p138
        %p398 = pneg %p162
        %p399 = pneg %p159
        %p400 = pneg %p183
        %p401 = pneg %p180
        %p402 = pneg %p204
        %p403 = pneg %p201
        %p404 = pneg %p225
        %p405 = pneg %p222
        %p406 = scmp.lt.s32.totalorder %s26, 1
        %s407 = scalar_select %p406, %s26, 1
        %s408 = smul.addr %s407, 2
        %s409 = smul.addr %s408, 8
        %s410 = scalar_lea.vmem %s3, %s409
        %p411 = scmp.eq.s32.totalorder %s26, 0
        // Predicated region
        $region73: #{tpu_custom_call.1} parent=51 // pred_check
          %p412 = pneg %p411
        $region74: #{tpu_custom_call.1} parent=51 // pred_check_branch
          %414 = sbr.rel (%p412) target = $region76
        $region75: #{tpu_custom_call.1} parent=51 // pred_region
          %v415 = vld [vmem:[%s0] sm:$0xff]
          %v416 = vld [vmem:[%s0 + $0x8] sm:$0xff]
          %vm417 = vcmask 64512
          %418 = vst.msk [vmem:[#allocation2] sm:$0xff] %vm417, %v415
          %419 = vst.msk [vmem:[#allocation2 + $0x8] sm:$0xff] %vm417, %v416
          %420 = vst [vmem:[#allocation13] sm:$0xf] 0.0
        $region76: #{tpu_custom_call.1} parent=51 // pred_fallthru
          _
        %v421 = vld [vmem:[%s410] sm:$0xff]
        %v422 = vld [vmem:[%s410 + $0x8] sm:$0xff]
        %v423 = vld [vmem:[#allocation2] sm:$0xff]
        %v424 = vld [vmem:[#allocation2 + $0x8] sm:$0xff]
        %vm425 = vcmask 130048
        %v427 = vsel %vm425, %v421, 0
        %v430 = vsel %vm425, %v422, 0
        %432 = vmatprep.subr.mxu0 0.0
        %433 = vmatpush1.msra.mxu0 %v423
        %434 = vmatprep.subr.mxu0 0.0
        %435 = vmatpush1.msra.mxu0 %v424
        %436 = vmatprep.subr.mxu0 0.0
        %437 = vmatpush1.msra.mxu0 0.0
        %438 = vmatprep.subr.mxu0 0.0
        %439 = vmatpush1.msra.mxu0 0.0
        %440 = vmatprep.subr.mxu0 0.0
        %441 = vmatpush1.msra.mxu0 0.0
        %442 = vmatprep.subr.mxu0 0.0
        %443 = vmatpush1.msra.mxu0 0.0
        %444 = vmatprep.subr.mxu0 0.0
        %445 = vmatpush1.msra.mxu0 0.0
        %446 = vmatprep.subr.mxu0 0.0
        %447 = vmatpush1.msra.mxu0 0.0
        %448 = vmatprep.subr.mxu0 0.0
        %449 = vmatpush1.msra.mxu0 0.0
        %450 = vmatprep.subr.mxu0 0.0
        %451 = vmatpush1.msra.mxu0 0.0
        %452 = vmatprep.subr.mxu0 0.0
        %453 = vmatpush1.msra.mxu0 0.0
        %454 = vmatprep.subr.mxu0 0.0
        %455 = vmatpush1.msra.mxu0 0.0
        %456 = vmatprep.subr.mxu0 0.0
        %457 = vmatpush1.msra.mxu0 0.0
        %458 = vmatprep.subr.mxu0 0.0
        %459 = vmatpush1.msra.mxu0 0.0
        %460 = vmatprep.subr.mxu0 0.0
        %461 = vmatpush1.msra.mxu0 0.0
        %462 = vmatprep.subr.mxu0 0.0
        %463 = vmatpush1.msra.mxu0 0.0
        %464 = vmatprep.subr.mxu0 0.0
        %465 = vmatpush1.msra.mxu0 0.0
        %466 = vmatprep.subr.mxu0 0.0
        %467 = vmatpush1.msra.mxu0 0.0
        %468 = vmatprep.subr.mxu0 0.0
        %469 = vmatpush1.msra.mxu0 0.0
        %470 = vmatprep.subr.mxu0 0.0
        %471 = vmatpush1.msra.mxu0 0.0
        %472 = vmatprep.subr.mxu0 0.0
        %473 = vmatpush1.msra.mxu0 0.0
        %474 = vmatprep.subr.mxu0 0.0
        %475 = vmatpush1.msra.mxu0 0.0
        %476 = vmatprep.subr.mxu0 0.0
        %477 = vmatpush1.msra.mxu0 0.0
        %478 = vmatprep.subr.mxu0 0.0
        %479 = vmatpush1.msra.mxu0 0.0
        %480 = vmatprep.subr.mxu0 0.0
        %481 = vmatpush1.msra.mxu0 0.0
        %482 = vmatprep.subr.mxu0 0.0
        %483 = vmatpush1.msra.mxu0 0.0
        %484 = vmatprep.subr.mxu0 0.0
        %485 = vmatpush1.msra.mxu0 0.0
        %486 = vmatprep.subr.mxu0 0.0
        %487 = vmatpush1.msra.mxu0 0.0
        %488 = vmatprep.subr.mxu0 0.0
        %489 = vmatpush1.msra.mxu0 0.0
        %490 = vmatprep.subr.mxu0 0.0
        %491 = vmatpush1.msra.mxu0 0.0
        %492 = vmatprep.subr.mxu0 0.0
        %493 = vmatpush1.msra.mxu0 0.0
        %494 = vmatprep.subr.mxu0 0.0
        %495 = vmatpush1.msra.mxu0 0.0
        %496 = vmatprep.mubr.f32.mxu0 0.0
        %497 = vmatmul.mubr.f32.gmra.mrb[0].mxu0 %v427
        %v498 = vpop.f32.mrb[0].mxu0
        %v499 = vadd.f32 0.0, %v498
        %v500 = vpop.f32.mrb[0].mxu0
        %501 = vmatprep.mubr.f32.mxu0 0.0
        %502 = vmatmul.mubr.f32.gmra.mrb[0].mxu0 %v430
        %v503 = vpop.f32.mrb[0].mxu0
        %v504 = vadd.f32 0.0, %v503
        %v505 = vpop.f32.mrb[0].mxu0
        %506 = vdwg.mxu0
        %vm507 = vcmask 64512
        %508 = vst.msk [vmem:[#allocation2] sm:$0xff] %vm507, %v499
        %509 = vst.msk [vmem:[#allocation2 + $0x8] sm:$0xff] %vm507, %v504
        %v510 = vld [vmem:[%s5] sm:$0xff]
        %v512 = vsel %vm507, %v499, 0
        %v515 = vsel %vm507, %v504, 0
        %517 = vmatprep.subr.mxu0 0.0
        %518 = vmatpush1.msra.mxu0 %v510
        %519 = vmatprep.subr.mxu0 0.0
        %520 = vmatpush1.msra.mxu0 0.0
        %521 = vmatprep.subr.mxu0 0.0
        %522 = vmatpush1.msra.mxu0 0.0
        %523 = vmatprep.subr.mxu0 0.0
        %524 = vmatpush1.msra.mxu0 0.0
        %525 = vmatprep.subr.mxu0 0.0
        %526 = vmatpush1.msra.mxu0 0.0
        %527 = vmatprep.subr.mxu0 0.0
        %528 = vmatpush1.msra.mxu0 0.0
        %529 = vmatprep.subr.mxu0 0.0
        %530 = vmatpush1.msra.mxu0 0.0
        %531 = vmatprep.subr.mxu0 0.0
        %532 = vmatpush1.msra.mxu0 0.0
        %533 = vmatprep.subr.mxu0 0.0
        %534 = vmatpush1.msra.mxu0 0.0
        %535 = vmatprep.subr.mxu0 0.0
        %536 = vmatpush1.msra.mxu0 0.0
        %537 = vmatprep.subr.mxu0 0.0
        %538 = vmatpush1.msra.mxu0 0.0
        %539 = vmatprep.subr.mxu0 0.0
        %540 = vmatpush1.msra.mxu0 0.0
        %541 = vmatprep.subr.mxu0 0.0
        %542 = vmatpush1.msra.mxu0 0.0
        %543 = vmatprep.subr.mxu0 0.0
        %544 = vmatpush1.msra.mxu0 0.0
        %545 = vmatprep.subr.mxu0 0.0
        %546 = vmatpush1.msra.mxu0 0.0
        %547 = vmatprep.subr.mxu0 0.0
        %548 = vmatpush1.msra.mxu0 0.0
        %549 = vmatprep.subr.mxu0 0.0
        %550 = vmatpush1.msra.mxu0 0.0
        %551 = vmatprep.subr.mxu0 0.0
        %552 = vmatpush1.msra.mxu0 0.0
        %553 = vmatprep.subr.mxu0 0.0
        %554 = vmatpush1.msra.mxu0 0.0
        %555 = vmatprep.subr.mxu0 0.0
        %556 = vmatpush1.msra.mxu0 0.0
        %557 = vmatprep.subr.mxu0 0.0
        %558 = vmatpush1.msra.mxu0 0.0
        %559 = vmatprep.subr.mxu0 0.0
        %560 = vmatpush1.msra.mxu0 0.0
        %561 = vmatprep.subr.mxu0 0.0
        %562 = vmatpush1.msra.mxu0 0.0
        %563 = vmatprep.subr.mxu0 0.0
        %564 = vmatpush1.msra.mxu0 0.0
        %565 = vmatprep.subr.mxu0 0.0
        %566 = vmatpush1.msra.mxu0 0.0
        %567 = vmatprep.subr.mxu0 0.0
        %568 = vmatpush1.msra.mxu0 0.0
        %569 = vmatprep.subr.mxu0 0.0
        %570 = vmatpush1.msra.mxu0 0.0
        %571 = vmatprep.subr.mxu0 0.0
        %572 = vmatpush1.msra.mxu0 0.0
        %573 = vmatprep.subr.mxu0 0.0
        %574 = vmatpush1.msra.mxu0 0.0
        %575 = vmatprep.subr.mxu0 0.0
        %576 = vmatpush1.msra.mxu0 0.0
        %577 = vmatprep.subr.mxu0 0.0
        %578 = vmatpush1.msra.mxu0 0.0
        %579 = vmatprep.subr.mxu0 0.0
        %580 = vmatpush1.msra.mxu0 0.0
        %581 = vmatprep.mubr.f32.mxu0 0.0
        %582 = vmatmul.mubr.f32.gmra.mrb[0].mxu0 %v512
        %v583 = vpop.f32.mrb[0].mxu0
        %v584 = vadd.f32 0.0, %v583
        %v585 = vpop.f32.mrb[0].mxu0
        %586 = vmatprep.mubr.f32.mxu0 0.0
        %587 = vmatmul.mubr.f32.gmra.mrb[0].mxu0 %v515
        %v588 = vpop.f32.mrb[0].mxu0
        %v589 = vadd.f32 0.0, %v588
        %v590 = vpop.f32.mrb[0].mxu0
        %591 = vdwg.mxu0
        %v592 = vld [vmem:[%s346] sm:$0xff]
        %v593 = vld [vmem:[%s346 + $0x8] sm:$0xff]
        %v594 = vmul.f32 %v584, %v592
        %v595 = vmul.f32 %v589, %v593
        %s596 = sld [smem:[#allocation11 + %s26]]
        %s597 = smul.u32 %s26, 128
        %s598 = sld [smem:[#allocation10 + %s597]]
        %s599 = sand.u32 2147483647, %s598
        %s600 = sadd.s32 %s597, 1
        %s601 = sld [smem:[#allocation10 + %s600]]
        %s602 = sand.u32 2147483647, %s601
        %s603 = sadd.s32 %s597, 2
        %s604 = sld [smem:[#allocation10 + %s603]]
        %s605 = sand.u32 2147483647, %s604
        %s606 = sadd.s32 %s597, 3
        %s607 = sld [smem:[#allocation10 + %s606]]
        %s608 = sand.u32 2147483647, %s607
        %v609 = vld [vmem:[%s359] sm:$0xff]
        %v610 = vld [vmem:[%s359 + $0x8] sm:$0xff]
        %v611 = vld [vmem:[%s359 + $0x10] sm:$0xff]
        %v612 = vld [vmem:[%s359 + $0x18] sm:$0xff]
        %v613 = vld [vmem:[%s359 + $0x20] sm:$0xff]
        %v614 = vld [vmem:[%s359 + $0x28] sm:$0xff]
        %v615 = vld [vmem:[%s359 + $0x30] sm:$0xff]
        %v616 = vld [vmem:[%s359 + $0x38] sm:$0xff]
        %v617 = vld [vmem:[%s359 + $0x40] sm:$0xff]
        %v618 = vld [vmem:[%s359 + $0x48] sm:$0xff]
        %v619 = vld [vmem:[%s359 + $0x50] sm:$0xff]
        %v620 = vld [vmem:[%s359 + $0x58] sm:$0xff]
        %v621 = vld [vmem:[%s359 + $0x60] sm:$0xff]
        %v622 = vld [vmem:[%s359 + $0x68] sm:$0xff]
        %v623 = vld [vmem:[%s359 + $0x70] sm:$0xff]
        %v624 = vld [vmem:[%s359 + $0x78] sm:$0xff]
        %v625 = vld [vmem:[%s359 + $0x80] sm:$0xff]
        %v626 = vld [vmem:[%s359 + $0x88] sm:$0xff]
        %v627 = vld [vmem:[%s359 + $0x90] sm:$0xff]
        %v628 = vld [vmem:[%s359 + $0x98] sm:$0xff]
        %v629 = vld [vmem:[%s359 + $0xa0] sm:$0xff]
        %v630 = vld [vmem:[%s359 + $0xa8] sm:$0xff]
        %v631 = vld [vmem:[%s359 + $0xb0] sm:$0xff]
        %v632 = vld [vmem:[%s359 + $0xb8] sm:$0xff]
        %v633 = vld [vmem:[%s359 + $0xc0] sm:$0xff]
        %v634 = vld [vmem:[%s359 + $0xc8] sm:$0xff]
        %v635 = vld [vmem:[%s359 + $0xd0] sm:$0xff]
        %v636 = vld [vmem:[%s359 + $0xd8] sm:$0xff]
        %v637 = vld [vmem:[%s359 + $0xe0] sm:$0xff]
        %v638 = vld [vmem:[%s359 + $0xe8] sm:$0xff]
        %v639 = vld [vmem:[%s359 + $0xf0] sm:$0xff]
        %v640 = vld [vmem:[%s359 + $0xf8] sm:$0xff]
        %641 = vmatprep.subr.mxu0 %v610
        %642 = vmatpush1.msra.mxu0 %v609
        %643 = vmatprep.subr.mxu0 %v612
        %644 = vmatpush1.msra.mxu0 %v611
        %645 = vmatprep.subr.mxu0 %v614
        %646 = vmatpush1.msra.mxu0 %v613
        %647 = vmatprep.subr.mxu0 %v616
        %648 = vmatpush1.msra.mxu0 %v615
        %649 = vmatprep.subr.mxu0 %v618
        %650 = vmatpush1.msra.mxu0 %v617
        %651 = vmatprep.subr.mxu0 %v620
        %652 = vmatpush1.msra.mxu0 %v619
        %653 = vmatprep.subr.mxu0 %v622
        %654 = vmatpush1.msra.mxu0 %v621
        %655 = vmatprep.subr.mxu0 %v624
        %656 = vmatpush1.msra.mxu0 %v623
        %657 = vmatprep.subr.mxu0 %v626
        %658 = vmatpush1.msra.mxu0 %v625
        %659 = vmatprep.subr.mxu0 %v628
        %660 = vmatpush1.msra.mxu0 %v627
        %661 = vmatprep.subr.mxu0 %v630
        %662 = vmatpush1.msra.mxu0 %v629
        %663 = vmatprep.subr.mxu0 %v632
        %664 = vmatpush1.msra.mxu0 %v631
        %665 = vmatprep.subr.mxu0 %v634
        %666 = vmatpush1.msra.mxu0 %v633
        %667 = vmatprep.subr.mxu0 %v636
        %668 = vmatpush1.msra.mxu0 %v635
        %669 = vmatprep.subr.mxu0 %v638
        %670 = vmatpush1.msra.mxu0 %v637
        %671 = vmatprep.subr.mxu0 %v640
        %672 = vmatpush1.msra.mxu0 %v639
        %673 = vmatprep.subr.mxu0 0.0
        %674 = vmatpush1.msra.mxu0 0.0
        %675 = vmatprep.subr.mxu0 0.0
        %676 = vmatpush1.msra.mxu0 0.0
        %677 = vmatprep.subr.mxu0 0.0
        %678 = vmatpush1.msra.mxu0 0.0
        %679 = vmatprep.subr.mxu0 0.0
        %680 = vmatpush1.msra.mxu0 0.0
        %681 = vmatprep.subr.mxu0 0.0
        %682 = vmatpush1.msra.mxu0 0.0
        %683 = vmatprep.subr.mxu0 0.0
        %684 = vmatpush1.msra.mxu0 0.0
        %685 = vmatprep.subr.mxu0 0.0
        %686 = vmatpush1.msra.mxu0 0.0
        %687 = vmatprep.subr.mxu0 0.0
        %688 = vmatpush1.msra.mxu0 0.0
        %689 = vmatprep.subr.mxu0 0.0
        %690 = vmatpush1.msra.mxu0 0.0
        %691 = vmatprep.subr.mxu0 0.0
        %692 = vmatpush1.msra.mxu0 0.0
        %693 = vmatprep.subr.mxu0 0.0
        %694 = vmatpush1.msra.mxu0 0.0
        %695 = vmatprep.subr.mxu0 0.0
        %696 = vmatpush1.msra.mxu0 0.0
        %697 = vmatprep.subr.mxu0 0.0
        %698 = vmatpush1.msra.mxu0 0.0
        %699 = vmatprep.subr.mxu0 0.0
        %700 = vmatpush1.msra.mxu0 0.0
        %701 = vmatprep.subr.mxu0 0.0
        %702 = vmatpush1.msra.mxu0 0.0
        %703 = vmatprep.subr.mxu0 0.0
        %704 = vmatpush1.msra.mxu0 0.0
        %705 = vmatprep.mubr.f32.mxu0 0.0
        %706 = vmatmul.mubr.f32.gmra.mrb[0].mxu0 %v594
        %v707 = vpop.f32.mrb[0].mxu0
        %v708 = vadd.f32 0.0, %v707
        %v709 = vpop.f32.mrb[0].mxu0
        %v710 = vadd.f32 0.0, %v709
        %711 = vdwg.mxu0
        %v712 = vld [vmem:[#allocation7] sm:$0xf]
        %v713 = vmul.f32 %v708, %v712
        %v714 = vadd.f32 %v713, 0.0
        %s715 = scalar_lea.vmem [#allocation7], 4
        %v716 = vld [vmem:[%s715] sm:$0xf]
        %v717 = vmul.f32 %v710, %v716
        %v718 = vadd.f32 %v714, %v717
        %v719 = vstv %s599
        %v720 = vmul.f32 %v718, %v719
        %v721 = vtanh.pop %v720
        %v722 = vadd.f32 %v721, 0.0
        %s723 = scalar_lea.vmem %s359, 256 [#allocation9]
        %v724 = vld [vmem:[%s723] sm:$0xff]
        %v725 = vld [vmem:[%s723 + $0x8] sm:$0xff]
        %v726 = vld [vmem:[%s723 + $0x10] sm:$0xff]
        %v727 = vld [vmem:[%s723 + $0x18] sm:$0xff]
        %v728 = vld [vmem:[%s723 + $0x20] sm:$0xff]
        %v729 = vld [vmem:[%s723 + $0x28] sm:$0xff]
        %v730 = vld [vmem:[%s723 + $0x30] sm:$0xff]
        %v731 = vld [vmem:[%s723 + $0x38] sm:$0xff]
        %v732 = vld [vmem:[%s723 + $0x40] sm:$0xff]
        %v733 = vld [vmem:[%s723 + $0x48] sm:$0xff]
        %v734 = vld [vmem:[%s723 + $0x50] sm:$0xff]
        %v735 = vld [vmem:[%s723 + $0x58] sm:$0xff]
        %v736 = vld [vmem:[%s723 + $0x60] sm:$0xff]
        %v737 = vld [vmem:[%s723 + $0x68] sm:$0xff]
        %v738 = vld [vmem:[%s723 + $0x70] sm:$0xff]
        %v739 = vld [vmem:[%s723 + $0x78] sm:$0xff]
        %v740 = vld [vmem:[%s723 + $0x80] sm:$0xff]
        %v741 = vld [vmem:[%s723 + $0x88] sm:$0xff]
        %v742 = vld [vmem:[%s723 + $0x90] sm:$0xff]
        %v743 = vld [vmem:[%s723 + $0x98] sm:$0xff]
        %v744 = vld [vmem:[%s723 + $0xa0] sm:$0xff]
        %v745 = vld [vmem:[%s723 + $0xa8] sm:$0xff]
        %v746 = vld [vmem:[%s723 + $0xb0] sm:$0xff]
        %v747 = vld [vmem:[%s723 + $0xb8] sm:$0xff]
        %v748 = vld [vmem:[%s723 + $0xc0] sm:$0xff]
        %v749 = vld [vmem:[%s723 + $0xc8] sm:$0xff]
        %v750 = vld [vmem:[%s723 + $0xd0] sm:$0xff]
        %v751 = vld [vmem:[%s723 + $0xd8] sm:$0xff]
        %v752 = vld [vmem:[%s723 + $0xe0] sm:$0xff]
        %v753 = vld [vmem:[%s723 + $0xe8] sm:$0xff]
        %v754 = vld [vmem:[%s723 + $0xf0] sm:$0xff]
        %v755 = vld [vmem:[%s723 + $0xf8] sm:$0xff]
        %v757 = vrot.slane %v594, 4
        %759 = vmatprep.subr.mxu0 %v725
        %760 = vmatpush1.msra.mxu0 %v724
        %761 = vmatprep.subr.mxu0 %v727
        %762 = vmatpush1.msra.mxu0 %v726
        %763 = vmatprep.subr.mxu0 %v729
        %764 = vmatpush1.msra.mxu0 %v728
        %765 = vmatprep.subr.mxu0 %v731
        %766 = vmatpush1.msra.mxu0 %v730
        %767 = vmatprep.subr.mxu0 %v733
        %768 = vmatpush1.msra.mxu0 %v732
        %769 = vmatprep.subr.mxu0 %v735
        %770 = vmatpush1.msra.mxu0 %v734
        %771 = vmatprep.subr.mxu0 %v737
        %772 = vmatpush1.msra.mxu0 %v736
        %773 = vmatprep.subr.mxu0 %v739
        %774 = vmatpush1.msra.mxu0 %v738
        %775 = vmatprep.subr.mxu0 %v741
        %776 = vmatpush1.msra.mxu0 %v740
        %777 = vmatprep.subr.mxu0 %v743
        %778 = vmatpush1.msra.mxu0 %v742
        %779 = vmatprep.subr.mxu0 %v745
        %780 = vmatpush1.msra.mxu0 %v744
        %781 = vmatprep.subr.mxu0 %v747
        %782 = vmatpush1.msra.mxu0 %v746
        %783 = vmatprep.subr.mxu0 %v749
        %784 = vmatpush1.msra.mxu0 %v748
        %785 = vmatprep.subr.mxu0 %v751
        %786 = vmatpush1.msra.mxu0 %v750
        %787 = vmatprep.subr.mxu0 %v753
        %788 = vmatpush1.msra.mxu0 %v752
        %789 = vmatprep.subr.mxu0 %v755
        %790 = vmatpush1.msra.mxu0 %v754
        %791 = vmatprep.subr.mxu0 0.0
        %792 = vmatpush1.msra.mxu0 0.0
        %793 = vmatprep.subr.mxu0 0.0
        %794 = vmatpush1.msra.mxu0 0.0
        %795 = vmatprep.subr.mxu0 0.0
        %796 = vmatpush1.msra.mxu0 0.0
        %797 = vmatprep.subr.mxu0 0.0
        %798 = vmatpush1.msra.mxu0 0.0
        %799 = vmatprep.subr.mxu0 0.0
        %800 = vmatpush1.msra.mxu0 0.0
        %801 = vmatprep.subr.mxu0 0.0
        %802 = vmatpush1.msra.mxu0 0.0
        %803 = vmatprep.subr.mxu0 0.0
        %804 = vmatpush1.msra.mxu0 0.0
        %805 = vmatprep.subr.mxu0 0.0
        %806 = vmatpush1.msra.mxu0 0.0
        %807 = vmatprep.subr.mxu0 0.0
        %808 = vmatpush1.msra.mxu0 0.0
        %809 = vmatprep.subr.mxu0 0.0
        %810 = vmatpush1.msra.mxu0 0.0
        %811 = vmatprep.subr.mxu0 0.0
        %812 = vmatpush1.msra.mxu0 0.0
        %813 = vmatprep.subr.mxu0 0.0
        %814 = vmatpush1.msra.mxu0 0.0
        %815 = vmatprep.subr.mxu0 0.0
        %816 = vmatpush1.msra.mxu0 0.0
        %817 = vmatprep.subr.mxu0 0.0
        %818 = vmatpush1.msra.mxu0 0.0
        %819 = vmatprep.subr.mxu0 0.0
        %820 = vmatpush1.msra.mxu0 0.0
        %821 = vmatprep.subr.mxu0 0.0
        %822 = vmatpush1.msra.mxu0 0.0
        %823 = vmatprep.mubr.f32.mxu0 0.0
        %824 = vmatmul.mubr.f32.gmra.mrb[0].mxu0 %v757
        %v825 = vpop.f32.mrb[0].mxu0
        %v826 = vadd.f32 0.0, %v825
        %v827 = vpop.f32.mrb[0].mxu0
        %v828 = vadd.f32 0.0, %v827
        %829 = vdwg.mxu0
        %v830 = vmul.f32 %v826, %v712
        %v831 = vadd.f32 %v830, 0.0
        %v832 = vmul.f32 %v828, %v716
        %v833 = vadd.f32 %v831, %v832
        %v834 = vstv %s602
        %v835 = vmul.f32 %v833, %v834
        %v836 = vtanh.pop %v835
        %v837 = vadd.f32 %v722, %v836
        %s838 = scalar_lea.vmem %s359, 512 [#allocation9]
        %v839 = vld [vmem:[%s838] sm:$0xff]
        %v840 = vld [vmem:[%s838 + $0x8] sm:$0xff]
        %v841 = vld [vmem:[%s838 + $0x10] sm:$0xff]
        %v842 = vld [vmem:[%s838 + $0x18] sm:$0xff]
        %v843 = vld [vmem:[%s838 + $0x20] sm:$0xff]
        %v844 = vld [vmem:[%s838 + $0x28] sm:$0xff]
        %v845 = vld [vmem:[%s838 + $0x30] sm:$0xff]
        %v846 = vld [vmem:[%s838 + $0x38] sm:$0xff]
        %v847 = vld [vmem:[%s838 + $0x40] sm:$0xff]
        %v848 = vld [vmem:[%s838 + $0x48] sm:$0xff]
        %v849 = vld [vmem:[%s838 + $0x50] sm:$0xff]
        %v850 = vld [vmem:[%s838 + $0x58] sm:$0xff]
        %v851 = vld [vmem:[%s838 + $0x60] sm:$0xff]
        %v852 = vld [vmem:[%s838 + $0x68] sm:$0xff]
        %v853 = vld [vmem:[%s838 + $0x70] sm:$0xff]
        %v854 = vld [vmem:[%s838 + $0x78] sm:$0xff]
        %v855 = vld [vmem:[%s838 + $0x80] sm:$0xff]
        %v856 = vld [vmem:[%s838 + $0x88] sm:$0xff]
        %v857 = vld [vmem:[%s838 + $0x90] sm:$0xff]
        %v858 = vld [vmem:[%s838 + $0x98] sm:$0xff]
        %v859 = vld [vmem:[%s838 + $0xa0] sm:$0xff]
        %v860 = vld [vmem:[%s838 + $0xa8] sm:$0xff]
        %v861 = vld [vmem:[%s838 + $0xb0] sm:$0xff]
        %v862 = vld [vmem:[%s838 + $0xb8] sm:$0xff]
        %v863 = vld [vmem:[%s838 + $0xc0] sm:$0xff]
        %v864 = vld [vmem:[%s838 + $0xc8] sm:$0xff]
        %v865 = vld [vmem:[%s838 + $0xd0] sm:$0xff]
        %v866 = vld [vmem:[%s838 + $0xd8] sm:$0xff]
        %v867 = vld [vmem:[%s838 + $0xe0] sm:$0xff]
        %v868 = vld [vmem:[%s838 + $0xe8] sm:$0xff]
        %v869 = vld [vmem:[%s838 + $0xf0] sm:$0xff]
        %v870 = vld [vmem:[%s838 + $0xf8] sm:$0xff]
        %871 = vmatprep.subr.mxu0 %v840
        %872 = vmatpush1.msra.mxu0 %v839
        %873 = vmatprep.subr.mxu0 %v842
        %874 = vmatpush1.msra.mxu0 %v841
        %875 = vmatprep.subr.mxu0 %v844
        %876 = vmatpush1.msra.mxu0 %v843
        %877 = vmatprep.subr.mxu0 %v846
        %878 = vmatpush1.msra.mxu0 %v845
        %879 = vmatprep.subr.mxu0 %v848
        %880 = vmatpush1.msra.mxu0 %v847
        %881 = vmatprep.subr.mxu0 %v850
        %882 = vmatpush1.msra.mxu0 %v849
        %883 = vmatprep.subr.mxu0 %v852
        %884 = vmatpush1.msra.mxu0 %v851
        %885 = vmatprep.subr.mxu0 %v854
        %886 = vmatpush1.msra.mxu0 %v853
        %887 = vmatprep.subr.mxu0 %v856
        %888 = vmatpush1.msra.mxu0 %v855
        %889 = vmatprep.subr.mxu0 %v858
        %890 = vmatpush1.msra.mxu0 %v857
        %891 = vmatprep.subr.mxu0 %v860
        %892 = vmatpush1.msra.mxu0 %v859
        %893 = vmatprep.subr.mxu0 %v862
        %894 = vmatpush1.msra.mxu0 %v861
        %895 = vmatprep.subr.mxu0 %v864
        %896 = vmatpush1.msra.mxu0 %v863
        %897 = vmatprep.subr.mxu0 %v866
        %898 = vmatpush1.msra.mxu0 %v865
        %899 = vmatprep.subr.mxu0 %v868
        %900 = vmatpush1.msra.mxu0 %v867
        %901 = vmatprep.subr.mxu0 %v870
        %902 = vmatpush1.msra.mxu0 %v869
        %903 = vmatprep.subr.mxu0 0.0
        %904 = vmatpush1.msra.mxu0 0.0
        %905 = vmatprep.subr.mxu0 0.0
        %906 = vmatpush1.msra.mxu0 0.0
        %907 = vmatprep.subr.mxu0 0.0
        %908 = vmatpush1.msra.mxu0 0.0
        %909 = vmatprep.subr.mxu0 0.0
        %910 = vmatpush1.msra.mxu0 0.0
        %911 = vmatprep.subr.mxu0 0.0
        %912 = vmatpush1.msra.mxu0 0.0
        %913 = vmatprep.subr.mxu0 0.0
        %914 = vmatpush1.msra.mxu0 0.0
        %915 = vmatprep.subr.mxu0 0.0
        %916 = vmatpush1.msra.mxu0 0.0
        %917 = vmatprep.subr.mxu0 0.0
        %918 = vmatpush1.msra.mxu0 0.0
        %919 = vmatprep.subr.mxu0 0.0
        %920 = vmatpush1.msra.mxu0 0.0
        %921 = vmatprep.subr.mxu0 0.0
        %922 = vmatpush1.msra.mxu0 0.0
        %923 = vmatprep.subr.mxu0 0.0
        %924 = vmatpush1.msra.mxu0 0.0
        %925 = vmatprep.subr.mxu0 0.0
        %926 = vmatpush1.msra.mxu0 0.0
        %927 = vmatprep.subr.mxu0 0.0
        %928 = vmatpush1.msra.mxu0 0.0
        %929 = vmatprep.subr.mxu0 0.0
        %930 = vmatpush1.msra.mxu0 0.0
        %931 = vmatprep.subr.mxu0 0.0
        %932 = vmatpush1.msra.mxu0 0.0
        %933 = vmatprep.subr.mxu0 0.0
        %934 = vmatpush1.msra.mxu0 0.0
        %935 = vmatprep.mubr.f32.mxu0 0.0
        %936 = vmatmul.mubr.f32.gmra.mrb[0].mxu0 %v595
        %v937 = vpop.f32.mrb[0].mxu0
        %v938 = vadd.f32 0.0, %v937
        %v939 = vpop.f32.mrb[0].mxu0
        %v940 = vadd.f32 0.0, %v939
        %941 = vdwg.mxu0
        %v942 = vmul.f32 %v938, %v712
        %v943 = vadd.f32 %v942, 0.0
        %v944 = vmul.f32 %v940, %v716
        %v945 = vadd.f32 %v943, %v944
        %v946 = vstv %s605
        %v947 = vmul.f32 %v945, %v946
        %v948 = vtanh.pop %v947
        %v949 = vadd.f32 %v837, %v948
        %s950 = scalar_lea.vmem %s359, 768 [#allocation9]
        %v951 = vld [vmem:[%s950] sm:$0xff]
        %v952 = vld [vmem:[%s950 + $0x8] sm:$0xff]
        %v953 = vld [vmem:[%s950 + $0x10] sm:$0xff]
        %v954 = vld [vmem:[%s950 + $0x18] sm:$0xff]
        %v955 = vld [vmem:[%s950 + $0x20] sm:$0xff]
        %v956 = vld [vmem:[%s950 + $0x28] sm:$0xff]
        %v957 = vld [vmem:[%s950 + $0x30] sm:$0xff]
        %v958 = vld [vmem:[%s950 + $0x38] sm:$0xff]
        %v959 = vld [vmem:[%s950 + $0x40] sm:$0xff]
        %v960 = vld [vmem:[%s950 + $0x48] sm:$0xff]
        %v961 = vld [vmem:[%s950 + $0x50] sm:$0xff]
        %v962 = vld [vmem:[%s950 + $0x58] sm:$0xff]
        %v963 = vld [vmem:[%s950 + $0x60] sm:$0xff]
        %v964 = vld [vmem:[%s950 + $0x68] sm:$0xff]
        %v965 = vld [vmem:[%s950 + $0x70] sm:$0xff]
        %v966 = vld [vmem:[%s950 + $0x78] sm:$0xff]
        %v967 = vld [vmem:[%s950 + $0x80] sm:$0xff]
        %v968 = vld [vmem:[%s950 + $0x88] sm:$0xff]
        %v969 = vld [vmem:[%s950 + $0x90] sm:$0xff]
        %v970 = vld [vmem:[%s950 + $0x98] sm:$0xff]
        %v971 = vld [vmem:[%s950 + $0xa0] sm:$0xff]
        %v972 = vld [vmem:[%s950 + $0xa8] sm:$0xff]
        %v973 = vld [vmem:[%s950 + $0xb0] sm:$0xff]
        %v974 = vld [vmem:[%s950 + $0xb8] sm:$0xff]
        %v975 = vld [vmem:[%s950 + $0xc0] sm:$0xff]
        %v976 = vld [vmem:[%s950 + $0xc8] sm:$0xff]
        %v977 = vld [vmem:[%s950 + $0xd0] sm:$0xff]
        %v978 = vld [vmem:[%s950 + $0xd8] sm:$0xff]
        %v979 = vld [vmem:[%s950 + $0xe0] sm:$0xff]
        %v980 = vld [vmem:[%s950 + $0xe8] sm:$0xff]
        %v981 = vld [vmem:[%s950 + $0xf0] sm:$0xff]
        %v982 = vld [vmem:[%s950 + $0xf8] sm:$0xff]
        %v984 = vrot.slane %v595, 4
        %986 = vmatprep.subr.mxu0 %v952
        %987 = vmatpush1.msra.mxu0 %v951
        %988 = vmatprep.subr.mxu0 %v954
        %989 = vmatpush1.msra.mxu0 %v953
        %990 = vmatprep.subr.mxu0 %v956
        %991 = vmatpush1.msra.mxu0 %v955
        %992 = vmatprep.subr.mxu0 %v958
        %993 = vmatpush1.msra.mxu0 %v957
        %994 = vmatprep.subr.mxu0 %v960
        %995 = vmatpush1.msra.mxu0 %v959
        %996 = vmatprep.subr.mxu0 %v962
        %997 = vmatpush1.msra.mxu0 %v961
        %998 = vmatprep.subr.mxu0 %v964
        %999 = vmatpush1.msra.mxu0 %v963
        %1000 = vmatprep.subr.mxu0 %v966
        %1001 = vmatpush1.msra.mxu0 %v965
        %1002 = vmatprep.subr.mxu0 %v968
        %1003 = vmatpush1.msra.mxu0 %v967
        %1004 = vmatprep.subr.mxu0 %v970
        %1005 = vmatpush1.msra.mxu0 %v969
        %1006 = vmatprep.subr.mxu0 %v972
        %1007 = vmatpush1.msra.mxu0 %v971
        %1008 = vmatprep.subr.mxu0 %v974
        %1009 = vmatpush1.msra.mxu0 %v973
        %1010 = vmatprep.subr.mxu0 %v976
        %1011 = vmatpush1.msra.mxu0 %v975
        %1012 = vmatprep.subr.mxu0 %v978
        %1013 = vmatpush1.msra.mxu0 %v977
        %1014 = vmatprep.subr.mxu0 %v980
        %1015 = vmatpush1.msra.mxu0 %v979
        %1016 = vmatprep.subr.mxu0 %v982
        %1017 = vmatpush1.msra.mxu0 %v981
        %1018 = vmatprep.subr.mxu0 0.0
        %1019 = vmatpush1.msra.mxu0 0.0
        %1020 = vmatprep.subr.mxu0 0.0
        %1021 = vmatpush1.msra.mxu0 0.0
        %1022 = vmatprep.subr.mxu0 0.0
        %1023 = vmatpush1.msra.mxu0 0.0
        %1024 = vmatprep.subr.mxu0 0.0
        %1025 = vmatpush1.msra.mxu0 0.0
        %1026 = vmatprep.subr.mxu0 0.0
        %1027 = vmatpush1.msra.mxu0 0.0
        %1028 = vmatprep.subr.mxu0 0.0
        %1029 = vmatpush1.msra.mxu0 0.0
        %1030 = vmatprep.subr.mxu0 0.0
        %1031 = vmatpush1.msra.mxu0 0.0
        %1032 = vmatprep.subr.mxu0 0.0
        %1033 = vmatpush1.msra.mxu0 0.0
        %1034 = vmatprep.subr.mxu0 0.0
        %1035 = vmatpush1.msra.mxu0 0.0
        %1036 = vmatprep.subr.mxu0 0.0
        %1037 = vmatpush1.msra.mxu0 0.0
        %1038 = vmatprep.subr.mxu0 0.0
        %1039 = vmatpush1.msra.mxu0 0.0
        %1040 = vmatprep.subr.mxu0 0.0
        %1041 = vmatpush1.msra.mxu0 0.0
        %1042 = vmatprep.subr.mxu0 0.0
        %1043 = vmatpush1.msra.mxu0 0.0
        %1044 = vmatprep.subr.mxu0 0.0
        %1045 = vmatpush1.msra.mxu0 0.0
        %1046 = vmatprep.subr.mxu0 0.0
        %1047 = vmatpush1.msra.mxu0 0.0
        %1048 = vmatprep.subr.mxu0 0.0
        %1049 = vmatpush1.msra.mxu0 0.0
        %1050 = vmatprep.mubr.f32.mxu0 0.0
        %1051 = vmatmul.mubr.f32.gmra.mrb[0].mxu0 %v984
        %v1052 = vpop.f32.mrb[0].mxu0
        %v1053 = vadd.f32 0.0, %v1052
        %v1054 = vpop.f32.mrb[0].mxu0
        %v1055 = vadd.f32 0.0, %v1054
        %1056 = vdwg.mxu0
        %v1057 = vmul.f32 %v1053, %v712
        %v1058 = vadd.f32 %v1057, 0.0
        %v1059 = vmul.f32 %v1055, %v716
        %v1060 = vadd.f32 %v1058, %v1059
        %v1061 = vstv %s608
        %v1062 = vmul.f32 %v1060, %v1061
        %v1063 = vtanh.pop %v1062
        %v1064 = vadd.f32 %v949, %v1063
        %v1065 = vld [vmem:[#allocation13] sm:$0xf]
        %v1066 = vstv %s596
        %v1067 = vmul.f32 %v1066, %v1064
        %v1068 = vadd.f32 %v1065, %v1067
        %1069 = vst [vmem:[#allocation13] sm:$0xf] %v1068
        // Predicated region
        $region77: #{tpu_custom_call.1} parent=51 // pred_check
          %p1070 = pneg %p222
        $region78: #{tpu_custom_call.1} parent=51 // pred_check_branch
          %1072 = sbr.rel (%p1070) target = $region80
        $region79: #{tpu_custom_call.1} parent=51 // pred_region
          %s1074 = ssub.s32 64, 64
          %1075 = vsyncadd [#allocation5], %s1074
          %s1077 = sshll.u32 [#allocation13], 4
          %s1078 = int_to_ptr.vmem [resolvable:$true] %s1077
          %1080 = dma.vmem_to_hbm [thread:$0]  %s1078, 64, %s8, [#allocation5]
        $region80: #{tpu_custom_call.1} parent=51 // pred_fallthru
          _
        // Predicated region
        $region81: #{tpu_custom_call.1} parent=51 // pred_check
          %p1081 = pneg %p222
        $region82: #{tpu_custom_call.1} parent=51 // pred_check_branch
          %1083 = sbr.rel (%p1081) target = $region84
        $region83: #{tpu_custom_call.1} parent=51 // pred_region
          %1084 = dma.done [#allocation5], 64
        $region84: #{tpu_custom_call.1} parent=51 // pred_fallthru
          _
      $region52: #{tpu_custom_call.1} parent=5 // pred_fallthru
        _
      %p1085 = scmp.le.s32.totalorder 2, %s21
      // Predicated region
      $region85: #{tpu_custom_call.1} parent=5 // pred_check
        %p1086 = pneg %p1085
      $region86: #{tpu_custom_call.1} parent=5 // pred_check_branch
        %1088 = sbr.rel (%p1086) target = $region88
      $region87: #{tpu_custom_call.1} parent=5 // pred_region
        %s1089 = ssub.s32 %s21, 2
      $region88: #{tpu_custom_call.1} parent=5 // pred_fallthru
        _
    $region6: #{tpu_custom_call.1} parent=1 // loop_footer
      %s25 = sadd.s32 1, %s21
    $region7: #{tpu_custom_call.1} parent=1 // loop_footer_branch
      %20 = sbr.rel target = $region3
    $region8: #{tpu_custom_call.1} parent=1 // loop_exit
      _
    %1090 = vsyncpa [#allocation4], 1
    %s1091 = scalar_lea.sflag [#allocation4], 1
    %1092 = vsyncpa %s1091, 1
    %1093 = vsyncpa [#allocation8], 1
    %1094 = vsyncpa [#allocation5], 1
    %s1095 = scalar_lea.sflag [#allocation5], 1
    %1096 = vsyncpa %s1095, 1
    %1097 = vsyncpa [#allocation6], 1
    %s1098 = scalar_lea.sflag [#allocation6], 1
    %1099 = vsyncpa %s1098, 1
    %1100 = vsyncpa [#allocation12], 1

</llo_original>
